<compile_context>
chip_gen: v5e
topology: v5e:2x2
jax: 0.10.0
libtpu: 0.0.40
codegen_flags: <defaults>
</compile_context>

<pallas_src>
import jax
import jax.numpy as jnp
import numpy as np
from jax.experimental import pallas as pl
from jax.experimental.pallas import tpu as pltpu

C_IN, C_MID, C_OUT = 144, 576, 96
H = W = 7
HW = H * W
BN_EPS = 1e-3


def _fused_kernel(x142_ref, x139_ref, w1_ref, b1_ref, w2_ref,
                  gamma_ref, beta_ref, out_ref):
    # conv2d49 on a 1x1 spatial map: per-output-channel dot product.
    # (576,144) * (1,144) sublane-broadcast, lane reduce -> (576,1) column.
    s = jnp.sum(w1_ref[...] * x142_ref[...], axis=1, keepdims=True) + b1_ref[...]

    # Hardsigmoid: clip(x/6 + 1/2, 0, 1)
    s = jnp.clip(s * (1.0 / 6.0) + 0.5, 0.0, 1.0)                      # (576,1)

    # SE scaling: per-channel scale broadcast over the 49 spatial lanes.
    y = x139_ref[...] * s                                              # (576,49)

    # conv2d50 (bias=False): 1x1 conv == (96,576) @ (576,49) MXU matmul;
    # output is already in natural NCHW order.
    z = jnp.dot(w2_ref[...], y, preferred_element_type=jnp.float32)    # (96,49)

    # BatchNorm2d in default .train() mode: biased batch stats over the
    # N*H*W = 49 positions, eps=1e-3; affine folded into scale/shift.
    mean = jnp.mean(z, axis=1, keepdims=True)                          # (96,1)
    var = jnp.mean((z - mean) ** 2, axis=1, keepdims=True)             # (96,1)
    scale = gamma_ref[...] * jax.lax.rsqrt(var + BN_EPS)               # (96,1)
    shift = beta_ref[...] - mean * scale                               # (96,1)
    out_ref[...] = z * scale + shift                                   # (96,49)


def prepare_params(w1, b1, w2, gamma, beta):
    """One-time layout plumbing for the static parameters (no per-call cost).

    All of these are pure reshapes / dtype casts — no transposes needed since
    the kernel consumes the natural (out_ch, in_ch) weight order.
    """
    return (
        w1.reshape(C_MID, C_IN).astype(jnp.float32),    # (576,144)
        b1.reshape(C_MID, 1).astype(jnp.float32),       # (576,1)
        w2.reshape(C_OUT, C_MID).astype(jnp.float32),   # (96,576)
        gamma.reshape(C_OUT, 1).astype(jnp.float32),    # (96,1)
        beta.reshape(C_OUT, 1).astype(jnp.float32),     # (96,1)
    )


def se_project_bn(x142, x139, w1_p, b1_p, w2_p, gamma_p, beta_p):
    """x142: (1,144,1,1), x139: (1,576,7,7) -> (1,96,7,7), all f32."""
    # Pure reshapes (contiguous), no transposes, no extra HBM roundtrips.
    x142_row = x142.reshape(1, C_IN).astype(jnp.float32)               # (1,144)
    x139_nat = x139.reshape(C_MID, HW).astype(jnp.float32)             # (576,49)

    inputs = (x142_row, x139_nat, w1_p, b1_p, w2_p, gamma_p, beta_p)

    out = pl.pallas_call(
        _fused_kernel,
        out_shape=jax.ShapeDtypeStruct((C_OUT, HW), jnp.float32),
        in_specs=[pl.BlockSpec(memory_space=pltpu.MemorySpace.VMEM)
                  for _ in inputs],
        out_specs=pl.BlockSpec(memory_space=pltpu.MemorySpace.VMEM),
        cost_estimate=pl.CostEstimate(
            flops=5_640_000, transcendentals=96, bytes_accessed=690_000),
    )(*inputs)

    # Contiguous reshape back to NCHW — no data movement.
    return out.reshape(1, C_OUT, H, W)


def _reference(x142, x139, w1, b1, w2, gamma, beta):
    """Plain-JAX reference mirroring the PyTorch forward (training-mode BN)."""
    v = x142.reshape(C_IN)
    s = w1.reshape(C_MID, C_IN) @ v + b1               # (576,)
    s = jnp.clip(s / 6.0 + 0.5, 0.0, 1.0)
    y = s[:, None] * x139.reshape(C_MID, HW)           # (576,49)
    z = w2.reshape(C_OUT, C_MID) @ y                   # (96,49)
    mean = z.mean(axis=1, keepdims=True)
    var = ((z - mean) ** 2).mean(axis=1, keepdims=True)
    out = gamma[:, None] * (z - mean) / jnp.sqrt(var + BN_EPS) + beta[:, None]
    return out.reshape(1, C_OUT, H, W)


if __name__ == "__main__":
    key = jax.random.PRNGKey(0)
    k_x142, k_x139, k_w1, k_b1, k_w2 = jax.random.split(key, 5)

    # Example inputs (the module's forward fixes these channel/spatial sizes).
    x142 = jax.random.normal(k_x142, (1, C_IN, 1, 1), dtype=jnp.float32)
    x139 = jax.random.normal(k_x139, (1, C_MID, H, W), dtype=jnp.float32)

    # Deterministic parameter init (shapes from the module's __init__).
    w1 = jax.random.normal(k_w1, (C_MID, C_IN, 1, 1), dtype=jnp.float32) * (1.0 / np.sqrt(C_IN))
    b1 = jax.random.normal(k_b1, (C_MID,), dtype=jnp.float32) * 0.1
    w2 = jax.random.normal(k_w2, (C_OUT, C_MID, 1, 1), dtype=jnp.float32) * (1.0 / np.sqrt(C_MID))
    gamma = jnp.ones((C_OUT,), dtype=jnp.float32)   # BatchNorm2d default affine init
    beta = jnp.zeros((C_OUT,), dtype=jnp.float32)

    # One-time parameter prep (cached across calls in a real deployment).
    params = prepare_params(w1, b1, w2, gamma, beta)
    apply_fn = jax.jit(se_project_bn)

    out = apply_fn(x142, x139, *params)
    out = jax.block_until_ready(out)

    ref = _reference(x142, x139, w1, b1, w2, gamma, beta)
    assert out.shape == (1, C_OUT, H, W)
    np.testing.assert_allclose(np.asarray(out), np.asarray(ref), rtol=1e-4, atol=1e-4)

    print("KERNEL_OK")
</pallas_src>

<mosaic_0001>
module attributes {stable_mosaic.version = 11 : i64} {
  func.func @_fused_kernel(%arg0: memref<1x144xf32, #tpu.memory_space<vmem>>, %arg1: memref<576x49xf32, #tpu.memory_space<vmem>>, %arg2: memref<576x144xf32, #tpu.memory_space<vmem>>, %arg3: memref<576x1xf32, #tpu.memory_space<vmem>>, %arg4: memref<96x576xf32, #tpu.memory_space<vmem>>, %arg5: memref<96x1xf32, #tpu.memory_space<vmem>>, %arg6: memref<96x1xf32, #tpu.memory_space<vmem>>, %arg7: memref<96x49xf32, #tpu.memory_space<vmem>>) attributes {dimension_semantics = [], scalar_prefetch = 0 : i64, scratch_operands = 0 : i64, tpu.core_type = #tpu.core_type<tc>} {
    %c0 = arith.constant 0 : index
    %c0_0 = arith.constant 0 : index
    %0 = vector.load %arg2[%c0, %c0_0] : memref<576x144xf32, #tpu.memory_space<vmem>>, vector<576x144xf32>
    %c0_1 = arith.constant 0 : index
    %c0_2 = arith.constant 0 : index
    %1 = vector.load %arg0[%c0_1, %c0_2] : memref<1x144xf32, #tpu.memory_space<vmem>>, vector<1x144xf32>
    %2 = vector.broadcast %1 : vector<1x144xf32> to vector<576x144xf32>
    %3 = arith.mulf %0, %2 : vector<576x144xf32>
    %cst = arith.constant dense<0.000000e+00> : vector<576xf32>
    %4 = vector.multi_reduction <add>, %3, %cst [1] : vector<576x144xf32> to vector<576xf32>
    %5 = vector.shape_cast %4 : vector<576xf32> to vector<576x1xf32>
    %c0_3 = arith.constant 0 : index
    %c0_4 = arith.constant 0 : index
    %6 = vector.load %arg3[%c0_3, %c0_4] : memref<576x1xf32, #tpu.memory_space<vmem>>, vector<576x1xf32>
    %7 = arith.addf %5, %6 : vector<576x1xf32>
    %cst_5 = arith.constant 0.166666672 : f32
    %8 = vector.broadcast %cst_5 : f32 to vector<576x1xf32>
    %9 = arith.mulf %7, %8 : vector<576x1xf32>
    %cst_6 = arith.constant 5.000000e-01 : f32
    %10 = vector.broadcast %cst_6 : f32 to vector<576x1xf32>
    %11 = arith.addf %9, %10 : vector<576x1xf32>
    %cst_7 = arith.constant 0.000000e+00 : f32
    %cst_8 = arith.constant 1.000000e+00 : f32
    %12 = vector.broadcast %cst_7 : f32 to vector<576x1xf32>
    %13 = arith.maximumf %12, %11 : vector<576x1xf32>
    %14 = vector.broadcast %cst_8 : f32 to vector<576x1xf32>
    %15 = arith.minimumf %14, %13 : vector<576x1xf32>
    %c0_9 = arith.constant 0 : index
    %c0_10 = arith.constant 0 : index
    %16 = vector.load %arg1[%c0_9, %c0_10] : memref<576x49xf32, #tpu.memory_space<vmem>>, vector<576x49xf32>
    %17 = vector.broadcast %15 : vector<576x1xf32> to vector<576x49xf32>
    %18 = arith.mulf %16, %17 : vector<576x49xf32>
    %c0_11 = arith.constant 0 : index
    %c0_12 = arith.constant 0 : index
    %19 = vector.load %arg4[%c0_11, %c0_12] : memref<96x576xf32, #tpu.memory_space<vmem>>, vector<96x576xf32>
    %cst_13 = arith.constant dense<0.000000e+00> : vector<96x49xf32>
    %20 = tpu.matmul %19, %18, %cst_13 {dimension_numbers = #tpu.dot_dimension_numbers<[1], [0], [0], [1], [0, 0, 1, 1], [], []>} : vector<96x576xf32>, vector<576x49xf32>, vector<96x49xf32> -> vector<96x49xf32>
    %cst_14 = arith.constant dense<0.000000e+00> : vector<96xf32>
    %21 = vector.multi_reduction <add>, %20, %cst_14 [1] : vector<96x49xf32> to vector<96xf32>
    %22 = vector.shape_cast %21 : vector<96xf32> to vector<96x1xf32>
    %cst_15 = arith.constant 4.900000e+01 : f32
    %23 = vector.broadcast %cst_15 : f32 to vector<96x1xf32>
    %24 = arith.divf %22, %23 : vector<96x1xf32>
    %25 = vector.broadcast %24 : vector<96x1xf32> to vector<96x49xf32>
    %26 = arith.subf %20, %25 : vector<96x49xf32>
    %27 = arith.mulf %26, %26 : vector<96x49xf32>
    %cst_16 = arith.constant dense<0.000000e+00> : vector<96xf32>
    %28 = vector.multi_reduction <add>, %27, %cst_16 [1] : vector<96x49xf32> to vector<96xf32>
    %29 = vector.shape_cast %28 : vector<96xf32> to vector<96x1xf32>
    %cst_17 = arith.constant 4.900000e+01 : f32
    %30 = vector.broadcast %cst_17 : f32 to vector<96x1xf32>
    %31 = arith.divf %29, %30 : vector<96x1xf32>
    %c0_18 = arith.constant 0 : index
    %c0_19 = arith.constant 0 : index
    %32 = vector.load %arg5[%c0_18, %c0_19] : memref<96x1xf32, #tpu.memory_space<vmem>>, vector<96x1xf32>
    %cst_20 = arith.constant 1.000000e-03 : f32
    %33 = vector.broadcast %cst_20 : f32 to vector<96x1xf32>
    %34 = arith.addf %31, %33 : vector<96x1xf32>
    %35 = math.rsqrt %34 : vector<96x1xf32>
    %36 = arith.mulf %32, %35 : vector<96x1xf32>
    %c0_21 = arith.constant 0 : index
    %c0_22 = arith.constant 0 : index
    %37 = vector.load %arg6[%c0_21, %c0_22] : memref<96x1xf32, #tpu.memory_space<vmem>>, vector<96x1xf32>
    %38 = arith.mulf %24, %36 : vector<96x1xf32>
    %39 = arith.subf %37, %38 : vector<96x1xf32>
    %40 = vector.broadcast %36 : vector<96x1xf32> to vector<96x49xf32>
    %41 = arith.mulf %20, %40 : vector<96x49xf32>
    %42 = vector.broadcast %39 : vector<96x1xf32> to vector<96x49xf32>
    %43 = arith.addf %41, %42 : vector<96x49xf32>
    %c0_23 = arith.constant 0 : index
    %c0_24 = arith.constant 0 : index
    %44 = vector.load %arg7[%c0_23, %c0_24] : memref<96x49xf32, #tpu.memory_space<vmem>>, vector<96x49xf32>
    tpu.vector_store %arg7[%c0_23, %c0_24], %43 {strides = array<i32>} : memref<96x49xf32, #tpu.memory_space<vmem>>, vector<96x49xf32>,
    return
  }
}

</mosaic_0001>

<llo_original>
// kernel: se_project_bn.1
$region0: #{se_project_bn.1}
  #allocation0 [shape = 'u32[]', space=smem, size = 0x4, offset = 0x4, fixed_abs, tag = 'smem constant byte address 0x4 - core index']
  #allocation1 [shape = 'u32[72,128]{1,0:T(1,128)}', space=vmem, size = 0x9000, scoped, tag = 'internal scratch']
  %s0 = inlined_call_operand.vmem [shape: f32[1,144], index: 0, kind: input, shape index: {}]
  %s1 = inlined_call_operand.vmem [shape: f32[576,49], index: 1, kind: input, shape index: {}]
  %s2 = inlined_call_operand.vmem [shape: f32[576,144], index: 2, kind: input, shape index: {}]
  %s3 = inlined_call_operand.vmem [shape: f32[576,1], index: 3, kind: input, shape index: {}]
  %s4 = inlined_call_operand.vmem [shape: f32[96,576], index: 4, kind: input, shape index: {}]
  %s5 = inlined_call_operand.vmem [shape: f32[96,1], index: 5, kind: input, shape index: {}]
  %s6 = inlined_call_operand.vmem [shape: f32[96,1], index: 6, kind: input, shape index: {}]
  %s7 = inlined_call_operand.vmem [shape: f32[96,49], index: 7, kind: output, shape index: {}]
  %s8 = sld [smem:[#allocation0]]
  $region38: #{se_project_bn.1} parent=0
    _
  %s10 = ssub.s32 1, %s8
  %s11 = scalar_select 0, %s10, %s8
  // Predicated region
  $region2: #{se_project_bn.1} parent=0 // pred_check
    _
  $region3: #{se_project_bn.1} parent=0 // pred_check_branch
    %13 = sbr.rel (0) target = $region5
  $region4: #{se_project_bn.1} parent=0 // pred_region
    _
  $region5: #{se_project_bn.1} parent=0 // pred_fallthru
    _
  // Predicated region
  $region6: #{se_project_bn.1} parent=0 // pred_check
    _
  $region7: #{se_project_bn.1} parent=0 // pred_check_branch
    %15 = sbr.rel (0) target = $region9
  $region8: #{se_project_bn.1} parent=0 // pred_region
    _
  $region9: #{se_project_bn.1} parent=0 // pred_fallthru
    _
  // Predicated region
  $region10: #{se_project_bn.1} parent=0 // pred_check
    _
  $region11: #{se_project_bn.1} parent=0 // pred_check_branch
    %17 = sbr.rel (0) target = $region13
  $region12: #{se_project_bn.1} parent=0 // pred_region
    _
  $region13: #{se_project_bn.1} parent=0 // pred_fallthru
    _
  // Predicated region
  $region14: #{se_project_bn.1} parent=0 // pred_check
    _
  $region15: #{se_project_bn.1} parent=0 // pred_check_branch
    %19 = sbr.rel (0) target = $region17
  $region16: #{se_project_bn.1} parent=0 // pred_region
    _
  $region17: #{se_project_bn.1} parent=0 // pred_fallthru
    _
  // Predicated region
  $region18: #{se_project_bn.1} parent=0 // pred_check
    _
  $region19: #{se_project_bn.1} parent=0 // pred_check_branch
    %21 = sbr.rel (0) target = $region21
  $region20: #{se_project_bn.1} parent=0 // pred_region
    _
  $region21: #{se_project_bn.1} parent=0 // pred_fallthru
    _
  // Predicated region
  $region22: #{se_project_bn.1} parent=0 // pred_check
    _
  $region23: #{se_project_bn.1} parent=0 // pred_check_branch
    %23 = sbr.rel (0) target = $region25
  $region24: #{se_project_bn.1} parent=0 // pred_region
    _
  $region25: #{se_project_bn.1} parent=0 // pred_fallthru
    _
  // Predicated region
  $region26: #{se_project_bn.1} parent=0 // pred_check
    _
  $region27: #{se_project_bn.1} parent=0 // pred_check_branch
    %25 = sbr.rel (0) target = $region29
  $region28: #{se_project_bn.1} parent=0 // pred_region
    _
  $region29: #{se_project_bn.1} parent=0 // pred_fallthru
    _
  %v26 = vld [vmem:[%s2] sm:$0xff]
  %v27 = vld [vmem:[%s2 + $0x8] sm:$0xff]
  %v28 = vld [vmem:[%s2 + $0x10] sm:$0xff]
  %v29 = vld [vmem:[%s2 + $0x18] sm:$0xff]
  %v30 = vld [vmem:[%s2 + $0x20] sm:$0xff]
  %v31 = vld [vmem:[%s2 + $0x28] sm:$0xff]
  %v32 = vld [vmem:[%s2 + $0x30] sm:$0xff]
  %v33 = vld [vmem:[%s2 + $0x38] sm:$0xff]
  %v34 = vld [vmem:[%s2 + $0x40] sm:$0xff]
  %v35 = vld [vmem:[%s2 + $0x48] sm:$0xff]
  %v36 = vld [vmem:[%s2 + $0x50] sm:$0xff]
  %v37 = vld [vmem:[%s2 + $0x58] sm:$0xff]
  %v38 = vld [vmem:[%s2 + $0x60] sm:$0xff]
  %v39 = vld [vmem:[%s2 + $0x68] sm:$0xff]
  %v40 = vld [vmem:[%s2 + $0x70] sm:$0xff]
  %v41 = vld [vmem:[%s2 + $0x78] sm:$0xff]
  %v42 = vld [vmem:[%s2 + $0x80] sm:$0xff]
  %v43 = vld [vmem:[%s2 + $0x88] sm:$0xff]
  %v44 = vld [vmem:[%s2 + $0x90] sm:$0xff]
  %v45 = vld [vmem:[%s2 + $0x98] sm:$0xff]
  %v46 = vld [vmem:[%s2 + $0xa0] sm:$0xff]
  %v47 = vld [vmem:[%s2 + $0xa8] sm:$0xff]
  %v48 = vld [vmem:[%s2 + $0xb0] sm:$0xff]
  %v49 = vld [vmem:[%s2 + $0xb8] sm:$0xff]
  %v50 = vld [vmem:[%s2 + $0xc0] sm:$0xff]
  %v51 = vld [vmem:[%s2 + $0xc8] sm:$0xff]
  %v52 = vld [vmem:[%s2 + $0xd0] sm:$0xff]
  %v53 = vld [vmem:[%s2 + $0xd8] sm:$0xff]
  %v54 = vld [vmem:[%s2 + $0xe0] sm:$0xff]
  %v55 = vld [vmem:[%s2 + $0xe8] sm:$0xff]
  %v56 = vld [vmem:[%s2 + $0xf0] sm:$0xff]
  %v57 = vld [vmem:[%s2 + $0xf8] sm:$0xff]
  %v58 = vld [vmem:[%s2 + $0x100] sm:$0xff]
  %v59 = vld [vmem:[%s2 + $0x108] sm:$0xff]
  %v60 = vld [vmem:[%s2 + $0x110] sm:$0xff]
  %v61 = vld [vmem:[%s2 + $0x118] sm:$0xff]
  %v62 = vld [vmem:[%s2 + $0x120] sm:$0xff]
  %v63 = vld [vmem:[%s2 + $0x128] sm:$0xff]
  %v64 = vld [vmem:[%s2 + $0x130] sm:$0xff]
  %v65 = vld [vmem:[%s2 + $0x138] sm:$0xff]
  %v66 = vld [vmem:[%s2 + $0x140] sm:$0xff]
  %v67 = vld [vmem:[%s2 + $0x148] sm:$0xff]
  %v68 = vld [vmem:[%s2 + $0x150] sm:$0xff]
  %v69 = vld [vmem:[%s2 + $0x158] sm:$0xff]
  %v70 = vld [vmem:[%s2 + $0x160] sm:$0xff]
  %v71 = vld [vmem:[%s2 + $0x168] sm:$0xff]
  %v72 = vld [vmem:[%s2 + $0x170] sm:$0xff]
  %v73 = vld [vmem:[%s2 + $0x178] sm:$0xff]
  %v74 = vld [vmem:[%s2 + $0x180] sm:$0xff]
  %v75 = vld [vmem:[%s2 + $0x188] sm:$0xff]
  %v76 = vld [vmem:[%s2 + $0x190] sm:$0xff]
  %v77 = vld [vmem:[%s2 + $0x198] sm:$0xff]
  %v78 = vld [vmem:[%s2 + $0x1a0] sm:$0xff]
  %v79 = vld [vmem:[%s2 + $0x1a8] sm:$0xff]
  %v80 = vld [vmem:[%s2 + $0x1b0] sm:$0xff]
  %v81 = vld [vmem:[%s2 + $0x1b8] sm:$0xff]
  %v82 = vld [vmem:[%s2 + $0x1c0] sm:$0xff]
  %v83 = vld [vmem:[%s2 + $0x1c8] sm:$0xff]
  %v84 = vld [vmem:[%s2 + $0x1d0] sm:$0xff]
  %v85 = vld [vmem:[%s2 + $0x1d8] sm:$0xff]
  %v86 = vld [vmem:[%s2 + $0x1e0] sm:$0xff]
  %v87 = vld [vmem:[%s2 + $0x1e8] sm:$0xff]
  %v88 = vld [vmem:[%s2 + $0x1f0] sm:$0xff]
  %v89 = vld [vmem:[%s2 + $0x1f8] sm:$0xff]
  %v90 = vld [vmem:[%s2 + $0x200] sm:$0xff]
  %v91 = vld [vmem:[%s2 + $0x208] sm:$0xff]
  %v92 = vld [vmem:[%s2 + $0x210] sm:$0xff]
  %v93 = vld [vmem:[%s2 + $0x218] sm:$0xff]
  %v94 = vld [vmem:[%s2 + $0x220] sm:$0xff]
  %v95 = vld [vmem:[%s2 + $0x228] sm:$0xff]
  %v96 = vld [vmem:[%s2 + $0x230] sm:$0xff]
  %v97 = vld [vmem:[%s2 + $0x238] sm:$0xff]
  %v98 = vld [vmem:[%s2 + $0x240] sm:$0xff]
  %v99 = vld [vmem:[%s2 + $0x248] sm:$0xff]
  %v100 = vld [vmem:[%s2 + $0x250] sm:$0xff]
  %v101 = vld [vmem:[%s2 + $0x258] sm:$0xff]
  %v102 = vld [vmem:[%s2 + $0x260] sm:$0xff]
  %v103 = vld [vmem:[%s2 + $0x268] sm:$0xff]
  %v104 = vld [vmem:[%s2 + $0x270] sm:$0xff]
  %v105 = vld [vmem:[%s2 + $0x278] sm:$0xff]
  %v106 = vld [vmem:[%s2 + $0x280] sm:$0xff]
  %v107 = vld [vmem:[%s2 + $0x288] sm:$0xff]
  %v108 = vld [vmem:[%s2 + $0x290] sm:$0xff]
  %v109 = vld [vmem:[%s2 + $0x298] sm:$0xff]
  %v110 = vld [vmem:[%s2 + $0x2a0] sm:$0xff]
  %v111 = vld [vmem:[%s2 + $0x2a8] sm:$0xff]
  %v112 = vld [vmem:[%s2 + $0x2b0] sm:$0xff]
  %v113 = vld [vmem:[%s2 + $0x2b8] sm:$0xff]
  %v114 = vld [vmem:[%s2 + $0x2c0] sm:$0xff]
  %v115 = vld [vmem:[%s2 + $0x2c8] sm:$0xff]
  %v116 = vld [vmem:[%s2 + $0x2d0] sm:$0xff]
  %v117 = vld [vmem:[%s2 + $0x2d8] sm:$0xff]
  %v118 = vld [vmem:[%s2 + $0x2e0] sm:$0xff]
  %v119 = vld [vmem:[%s2 + $0x2e8] sm:$0xff]
  %v120 = vld [vmem:[%s2 + $0x2f0] sm:$0xff]
  %v121 = vld [vmem:[%s2 + $0x2f8] sm:$0xff]
  %v122 = vld [vmem:[%s2 + $0x300] sm:$0xff]
  %v123 = vld [vmem:[%s2 + $0x308] sm:$0xff]
  %v124 = vld [vmem:[%s2 + $0x310] sm:$0xff]
  %v125 = vld [vmem:[%s2 + $0x318] sm:$0xff]
  %v126 = vld [vmem:[%s2 + $0x320] sm:$0xff]
  %v127 = vld [vmem:[%s2 + $0x328] sm:$0xff]
  %v128 = vld [vmem:[%s2 + $0x330] sm:$0xff]
  %v129 = vld [vmem:[%s2 + $0x338] sm:$0xff]
  %v130 = vld [vmem:[%s2 + $0x340] sm:$0xff]
  %v131 = vld [vmem:[%s2 + $0x348] sm:$0xff]
  %v132 = vld [vmem:[%s2 + $0x350] sm:$0xff]
  %v133 = vld [vmem:[%s2 + $0x358] sm:$0xff]
  %v134 = vld [vmem:[%s2 + $0x360] sm:$0xff]
  %v135 = vld [vmem:[%s2 + $0x368] sm:$0xff]
  %v136 = vld [vmem:[%s2 + $0x370] sm:$0xff]
  %v137 = vld [vmem:[%s2 + $0x378] sm:$0xff]
  %v138 = vld [vmem:[%s2 + $0x380] sm:$0xff]
  %v139 = vld [vmem:[%s2 + $0x388] sm:$0xff]
  %v140 = vld [vmem:[%s2 + $0x390] sm:$0xff]
  %v141 = vld [vmem:[%s2 + $0x398] sm:$0xff]
  %v142 = vld [vmem:[%s2 + $0x3a0] sm:$0xff]
  %v143 = vld [vmem:[%s2 + $0x3a8] sm:$0xff]
  %v144 = vld [vmem:[%s2 + $0x3b0] sm:$0xff]
  %v145 = vld [vmem:[%s2 + $0x3b8] sm:$0xff]
  %v146 = vld [vmem:[%s2 + $0x3c0] sm:$0xff]
  %v147 = vld [vmem:[%s2 + $0x3c8] sm:$0xff]
  %v148 = vld [vmem:[%s2 + $0x3d0] sm:$0xff]
  %v149 = vld [vmem:[%s2 + $0x3d8] sm:$0xff]
  %v150 = vld [vmem:[%s2 + $0x3e0] sm:$0xff]
  %v151 = vld [vmem:[%s2 + $0x3e8] sm:$0xff]
  %v152 = vld [vmem:[%s2 + $0x3f0] sm:$0xff]
  %v153 = vld [vmem:[%s2 + $0x3f8] sm:$0xff]
  %v154 = vld [vmem:[%s2 + $0x400] sm:$0xff]
  %v155 = vld [vmem:[%s2 + $0x408] sm:$0xff]
  %v156 = vld [vmem:[%s2 + $0x410] sm:$0xff]
  %v157 = vld [vmem:[%s2 + $0x418] sm:$0xff]
  %v158 = vld [vmem:[%s2 + $0x420] sm:$0xff]
  %v159 = vld [vmem:[%s2 + $0x428] sm:$0xff]
  %v160 = vld [vmem:[%s2 + $0x430] sm:$0xff]
  %v161 = vld [vmem:[%s2 + $0x438] sm:$0xff]
  %v162 = vld [vmem:[%s2 + $0x440] sm:$0xff]
  %v163 = vld [vmem:[%s2 + $0x448] sm:$0xff]
  %v164 = vld [vmem:[%s2 + $0x450] sm:$0xff]
  %v165 = vld [vmem:[%s2 + $0x458] sm:$0xff]
  %v166 = vld [vmem:[%s2 + $0x460] sm:$0xff]
  %v167 = vld [vmem:[%s2 + $0x468] sm:$0xff]
  %v168 = vld [vmem:[%s2 + $0x470] sm:$0xff]
  %v169 = vld [vmem:[%s2 + $0x478] sm:$0xff]
  %v170 = vld [vmem:[%s0] sm:$0x3]
  %v172 = vperm.slane %v170, 0
  %v173 = vperm.slane %v170, 1
  %v176 = vmul.f32 %v26, %v172
  %v177 = vmul.f32 %v27, %v173
  %v178 = vmul.f32 %v28, %v172
  %v179 = vmul.f32 %v29, %v173
  %v180 = vmul.f32 %v30, %v172
  %v181 = vmul.f32 %v31, %v173
  %v182 = vmul.f32 %v32, %v172
  %v183 = vmul.f32 %v33, %v173
  %v184 = vmul.f32 %v34, %v172
  %v185 = vmul.f32 %v35, %v173
  %v186 = vmul.f32 %v36, %v172
  %v187 = vmul.f32 %v37, %v173
  %v188 = vmul.f32 %v38, %v172
  %v189 = vmul.f32 %v39, %v173
  %v190 = vmul.f32 %v40, %v172
  %v191 = vmul.f32 %v41, %v173
  %v192 = vmul.f32 %v42, %v172
  %v193 = vmul.f32 %v43, %v173
  %v194 = vmul.f32 %v44, %v172
  %v195 = vmul.f32 %v45, %v173
  %v196 = vmul.f32 %v46, %v172
  %v197 = vmul.f32 %v47, %v173
  %v198 = vmul.f32 %v48, %v172
  %v199 = vmul.f32 %v49, %v173
  %v200 = vmul.f32 %v50, %v172
  %v201 = vmul.f32 %v51, %v173
  %v202 = vmul.f32 %v52, %v172
  %v203 = vmul.f32 %v53, %v173
  %v204 = vmul.f32 %v54, %v172
  %v205 = vmul.f32 %v55, %v173
  %v206 = vmul.f32 %v56, %v172
  %v207 = vmul.f32 %v57, %v173
  %v208 = vmul.f32 %v58, %v172
  %v209 = vmul.f32 %v59, %v173
  %v210 = vmul.f32 %v60, %v172
  %v211 = vmul.f32 %v61, %v173
  %v212 = vmul.f32 %v62, %v172
  %v213 = vmul.f32 %v63, %v173
  %v214 = vmul.f32 %v64, %v172
  %v215 = vmul.f32 %v65, %v173
  %v216 = vmul.f32 %v66, %v172
  %v217 = vmul.f32 %v67, %v173
  %v218 = vmul.f32 %v68, %v172
  %v219 = vmul.f32 %v69, %v173
  %v220 = vmul.f32 %v70, %v172
  %v221 = vmul.f32 %v71, %v173
  %v222 = vmul.f32 %v72, %v172
  %v223 = vmul.f32 %v73, %v173
  %v224 = vmul.f32 %v74, %v172
  %v225 = vmul.f32 %v75, %v173
  %v226 = vmul.f32 %v76, %v172
  %v227 = vmul.f32 %v77, %v173
  %v228 = vmul.f32 %v78, %v172
  %v229 = vmul.f32 %v79, %v173
  %v230 = vmul.f32 %v80, %v172
  %v231 = vmul.f32 %v81, %v173
  %v232 = vmul.f32 %v82, %v172
  %v233 = vmul.f32 %v83, %v173
  %v234 = vmul.f32 %v84, %v172
  %v235 = vmul.f32 %v85, %v173
  %v236 = vmul.f32 %v86, %v172
  %v237 = vmul.f32 %v87, %v173
  %v238 = vmul.f32 %v88, %v172
  %v239 = vmul.f32 %v89, %v173
  %v240 = vmul.f32 %v90, %v172
  %v241 = vmul.f32 %v91, %v173
  %v242 = vmul.f32 %v92, %v172
  %v243 = vmul.f32 %v93, %v173
  %v244 = vmul.f32 %v94, %v172
  %v245 = vmul.f32 %v95, %v173
  %v246 = vmul.f32 %v96, %v172
  %v247 = vmul.f32 %v97, %v173
  %v248 = vmul.f32 %v98, %v172
  %v249 = vmul.f32 %v99, %v173
  %v250 = vmul.f32 %v100, %v172
  %v251 = vmul.f32 %v101, %v173
  %v252 = vmul.f32 %v102, %v172
  %v253 = vmul.f32 %v103, %v173
  %v254 = vmul.f32 %v104, %v172
  %v255 = vmul.f32 %v105, %v173
  %v256 = vmul.f32 %v106, %v172
  %v257 = vmul.f32 %v107, %v173
  %v258 = vmul.f32 %v108, %v172
  %v259 = vmul.f32 %v109, %v173
  %v260 = vmul.f32 %v110, %v172
  %v261 = vmul.f32 %v111, %v173
  %v262 = vmul.f32 %v112, %v172
  %v263 = vmul.f32 %v113, %v173
  %v264 = vmul.f32 %v114, %v172
  %v265 = vmul.f32 %v115, %v173
  %v266 = vmul.f32 %v116, %v172
  %v267 = vmul.f32 %v117, %v173
  %v268 = vmul.f32 %v118, %v172
  %v269 = vmul.f32 %v119, %v173
  %v270 = vmul.f32 %v120, %v172
  %v271 = vmul.f32 %v121, %v173
  %v272 = vmul.f32 %v122, %v172
  %v273 = vmul.f32 %v123, %v173
  %v274 = vmul.f32 %v124, %v172
  %v275 = vmul.f32 %v125, %v173
  %v276 = vmul.f32 %v126, %v172
  %v277 = vmul.f32 %v127, %v173
  %v278 = vmul.f32 %v128, %v172
  %v279 = vmul.f32 %v129, %v173
  %v280 = vmul.f32 %v130, %v172
  %v281 = vmul.f32 %v131, %v173
  %v282 = vmul.f32 %v132, %v172
  %v283 = vmul.f32 %v133, %v173
  %v284 = vmul.f32 %v134, %v172
  %v285 = vmul.f32 %v135, %v173
  %v286 = vmul.f32 %v136, %v172
  %v287 = vmul.f32 %v137, %v173
  %v288 = vmul.f32 %v138, %v172
  %v289 = vmul.f32 %v139, %v173
  %v290 = vmul.f32 %v140, %v172
  %v291 = vmul.f32 %v141, %v173
  %v292 = vmul.f32 %v142, %v172
  %v293 = vmul.f32 %v143, %v173
  %v294 = vmul.f32 %v144, %v172
  %v295 = vmul.f32 %v145, %v173
  %v296 = vmul.f32 %v146, %v172
  %v297 = vmul.f32 %v147, %v173
  %v298 = vmul.f32 %v148, %v172
  %v299 = vmul.f32 %v149, %v173
  %v300 = vmul.f32 %v150, %v172
  %v301 = vmul.f32 %v151, %v173
  %v302 = vmul.f32 %v152, %v172
  %v303 = vmul.f32 %v153, %v173
  %v304 = vmul.f32 %v154, %v172
  %v305 = vmul.f32 %v155, %v173
  %v306 = vmul.f32 %v156, %v172
  %v307 = vmul.f32 %v157, %v173
  %v308 = vmul.f32 %v158, %v172
  %v309 = vmul.f32 %v159, %v173
  %v310 = vmul.f32 %v160, %v172
  %v311 = vmul.f32 %v161, %v173
  %v312 = vmul.f32 %v162, %v172
  %v313 = vmul.f32 %v163, %v173
  %v314 = vmul.f32 %v164, %v172
  %v315 = vmul.f32 %v165, %v173
  %v316 = vmul.f32 %v166, %v172
  %v317 = vmul.f32 %v167, %v173
  %v318 = vmul.f32 %v168, %v172
  %v319 = vmul.f32 %v169, %v173
  %vm320 = vcmask 130048
  %v321 = vsel %vm320, %v177, 0.0
  %v322 = vadd.f32 %v176, %v321
  %323 = vadd.xlane.f32.xlu0 %v322
  %v324 = vpop.xlane.xlu0 %323
  %v325 = vsel %vm320, %v179, 0.0
  %v326 = vadd.f32 %v178, %v325
  %327 = vadd.xlane.f32.xlu0 %v326
  %v328 = vpop.xlane.xlu0 %327
  %v329 = vsel %vm320, %v181, 0.0
  %v330 = vadd.f32 %v180, %v329
  %331 = vadd.xlane.f32.xlu0 %v330
  %v332 = vpop.xlane.xlu0 %331
  %v333 = vsel %vm320, %v183, 0.0
  %v334 = vadd.f32 %v182, %v333
  %335 = vadd.xlane.f32.xlu0 %v334
  %v336 = vpop.xlane.xlu0 %335
  %v337 = vsel %vm320, %v185, 0.0
  %v338 = vadd.f32 %v184, %v337
  %339 = vadd.xlane.f32.xlu0 %v338
  %v340 = vpop.xlane.xlu0 %339
  %v341 = vsel %vm320, %v187, 0.0
  %v342 = vadd.f32 %v186, %v341
  %343 = vadd.xlane.f32.xlu0 %v342
  %v344 = vpop.xlane.xlu0 %343
  %v345 = vsel %vm320, %v189, 0.0
  %v346 = vadd.f32 %v188, %v345
  %347 = vadd.xlane.f32.xlu0 %v346
  %v348 = vpop.xlane.xlu0 %347
  %v349 = vsel %vm320, %v191, 0.0
  %v350 = vadd.f32 %v190, %v349
  %351 = vadd.xlane.f32.xlu0 %v350
  %v352 = vpop.xlane.xlu0 %351
  %v353 = vsel %vm320, %v193, 0.0
  %v354 = vadd.f32 %v192, %v353
  %355 = vadd.xlane.f32.xlu0 %v354
  %v356 = vpop.xlane.xlu0 %355
  %v357 = vsel %vm320, %v195, 0.0
  %v358 = vadd.f32 %v194, %v357
  %359 = vadd.xlane.f32.xlu0 %v358
  %v360 = vpop.xlane.xlu0 %359
  %v361 = vsel %vm320, %v197, 0.0
  %v362 = vadd.f32 %v196, %v361
  %363 = vadd.xlane.f32.xlu0 %v362
  %v364 = vpop.xlane.xlu0 %363
  %v365 = vsel %vm320, %v199, 0.0
  %v366 = vadd.f32 %v198, %v365
  %367 = vadd.xlane.f32.xlu0 %v366
  %v368 = vpop.xlane.xlu0 %367
  %v369 = vsel %vm320, %v201, 0.0
  %v370 = vadd.f32 %v200, %v369
  %371 = vadd.xlane.f32.xlu0 %v370
  %v372 = vpop.xlane.xlu0 %371
  %v373 = vsel %vm320, %v203, 0.0
  %v374 = vadd.f32 %v202, %v373
  %375 = vadd.xlane.f32.xlu0 %v374
  %v376 = vpop.xlane.xlu0 %375
  %v377 = vsel %vm320, %v205, 0.0
  %v378 = vadd.f32 %v204, %v377
  %379 = vadd.xlane.f32.xlu0 %v378
  %v380 = vpop.xlane.xlu0 %379
  %v381 = vsel %vm320, %v207, 0.0
  %v382 = vadd.f32 %v206, %v381
  %383 = vadd.xlane.f32.xlu0 %v382
  %v384 = vpop.xlane.xlu0 %383
  %v385 = vsel %vm320, %v209, 0.0
  %v386 = vadd.f32 %v208, %v385
  %387 = vadd.xlane.f32.xlu0 %v386
  %v388 = vpop.xlane.xlu0 %387
  %v389 = vsel %vm320, %v211, 0.0
  %v390 = vadd.f32 %v210, %v389
  %391 = vadd.xlane.f32.xlu0 %v390
  %v392 = vpop.xlane.xlu0 %391
  %v393 = vsel %vm320, %v213, 0.0
  %v394 = vadd.f32 %v212, %v393
  %395 = vadd.xlane.f32.xlu0 %v394
  %v396 = vpop.xlane.xlu0 %395
  %v397 = vsel %vm320, %v215, 0.0
  %v398 = vadd.f32 %v214, %v397
  %399 = vadd.xlane.f32.xlu0 %v398
  %v400 = vpop.xlane.xlu0 %399
  %v401 = vsel %vm320, %v217, 0.0
  %v402 = vadd.f32 %v216, %v401
  %403 = vadd.xlane.f32.xlu0 %v402
  %v404 = vpop.xlane.xlu0 %403
  %v405 = vsel %vm320, %v219, 0.0
  %v406 = vadd.f32 %v218, %v405
  %407 = vadd.xlane.f32.xlu0 %v406
  %v408 = vpop.xlane.xlu0 %407
  %v409 = vsel %vm320, %v221, 0.0
  %v410 = vadd.f32 %v220, %v409
  %411 = vadd.xlane.f32.xlu0 %v410
  %v412 = vpop.xlane.xlu0 %411
  %v413 = vsel %vm320, %v223, 0.0
  %v414 = vadd.f32 %v222, %v413
  %415 = vadd.xlane.f32.xlu0 %v414
  %v416 = vpop.xlane.xlu0 %415
  %v417 = vsel %vm320, %v225, 0.0
  %v418 = vadd.f32 %v224, %v417
  %419 = vadd.xlane.f32.xlu0 %v418
  %v420 = vpop.xlane.xlu0 %419
  %v421 = vsel %vm320, %v227, 0.0
  %v422 = vadd.f32 %v226, %v421
  %423 = vadd.xlane.f32.xlu0 %v422
  %v424 = vpop.xlane.xlu0 %423
  %v425 = vsel %vm320, %v229, 0.0
  %v426 = vadd.f32 %v228, %v425
  %427 = vadd.xlane.f32.xlu0 %v426
  %v428 = vpop.xlane.xlu0 %427
  %v429 = vsel %vm320, %v231, 0.0
  %v430 = vadd.f32 %v230, %v429
  %431 = vadd.xlane.f32.xlu0 %v430
  %v432 = vpop.xlane.xlu0 %431
  %v433 = vsel %vm320, %v233, 0.0
  %v434 = vadd.f32 %v232, %v433
  %435 = vadd.xlane.f32.xlu0 %v434
  %v436 = vpop.xlane.xlu0 %435
  %v437 = vsel %vm320, %v235, 0.0
  %v438 = vadd.f32 %v234, %v437
  %439 = vadd.xlane.f32.xlu0 %v438
  %v440 = vpop.xlane.xlu0 %439
  %v441 = vsel %vm320, %v237, 0.0
  %v442 = vadd.f32 %v236, %v441
  %443 = vadd.xlane.f32.xlu0 %v442
  %v444 = vpop.xlane.xlu0 %443
  %v445 = vsel %vm320, %v239, 0.0
  %v446 = vadd.f32 %v238, %v445
  %447 = vadd.xlane.f32.xlu0 %v446
  %v448 = vpop.xlane.xlu0 %447
  %v449 = vsel %vm320, %v241, 0.0
  %v450 = vadd.f32 %v240, %v449
  %451 = vadd.xlane.f32.xlu0 %v450
  %v452 = vpop.xlane.xlu0 %451
  %v453 = vsel %vm320, %v243, 0.0
  %v454 = vadd.f32 %v242, %v453
  %455 = vadd.xlane.f32.xlu0 %v454
  %v456 = vpop.xlane.xlu0 %455
  %v457 = vsel %vm320, %v245, 0.0
  %v458 = vadd.f32 %v244, %v457
  %459 = vadd.xlane.f32.xlu0 %v458
  %v460 = vpop.xlane.xlu0 %459
  %v461 = vsel %vm320, %v247, 0.0
  %v462 = vadd.f32 %v246, %v461
  %463 = vadd.xlane.f32.xlu0 %v462
  %v464 = vpop.xlane.xlu0 %463
  %v465 = vsel %vm320, %v249, 0.0
  %v466 = vadd.f32 %v248, %v465
  %467 = vadd.xlane.f32.xlu0 %v466
  %v468 = vpop.xlane.xlu0 %467
  %v469 = vsel %vm320, %v251, 0.0
  %v470 = vadd.f32 %v250, %v469
  %471 = vadd.xlane.f32.xlu0 %v470
  %v472 = vpop.xlane.xlu0 %471
  %v473 = vsel %vm320, %v253, 0.0
  %v474 = vadd.f32 %v252, %v473
  %475 = vadd.xlane.f32.xlu0 %v474
  %v476 = vpop.xlane.xlu0 %475
  %v477 = vsel %vm320, %v255, 0.0
  %v478 = vadd.f32 %v254, %v477
  %479 = vadd.xlane.f32.xlu0 %v478
  %v480 = vpop.xlane.xlu0 %479
  %v481 = vsel %vm320, %v257, 0.0
  %v482 = vadd.f32 %v256, %v481
  %483 = vadd.xlane.f32.xlu0 %v482
  %v484 = vpop.xlane.xlu0 %483
  %v485 = vsel %vm320, %v259, 0.0
  %v486 = vadd.f32 %v258, %v485
  %487 = vadd.xlane.f32.xlu0 %v486
  %v488 = vpop.xlane.xlu0 %487
  %v489 = vsel %vm320, %v261, 0.0
  %v490 = vadd.f32 %v260, %v489
  %491 = vadd.xlane.f32.xlu0 %v490
  %v492 = vpop.xlane.xlu0 %491
  %v493 = vsel %vm320, %v263, 0.0
  %v494 = vadd.f32 %v262, %v493
  %495 = vadd.xlane.f32.xlu0 %v494
  %v496 = vpop.xlane.xlu0 %495
  %v497 = vsel %vm320, %v265, 0.0
  %v498 = vadd.f32 %v264, %v497
  %499 = vadd.xlane.f32.xlu0 %v498
  %v500 = vpop.xlane.xlu0 %499
  %v501 = vsel %vm320, %v267, 0.0
  %v502 = vadd.f32 %v266, %v501
  %503 = vadd.xlane.f32.xlu0 %v502
  %v504 = vpop.xlane.xlu0 %503
  %v505 = vsel %vm320, %v269, 0.0
  %v506 = vadd.f32 %v268, %v505
  %507 = vadd.xlane.f32.xlu0 %v506
  %v508 = vpop.xlane.xlu0 %507
  %v509 = vsel %vm320, %v271, 0.0
  %v510 = vadd.f32 %v270, %v509
  %511 = vadd.xlane.f32.xlu0 %v510
  %v512 = vpop.xlane.xlu0 %511
  %v513 = vsel %vm320, %v273, 0.0
  %v514 = vadd.f32 %v272, %v513
  %515 = vadd.xlane.f32.xlu0 %v514
  %v516 = vpop.xlane.xlu0 %515
  %v517 = vsel %vm320, %v275, 0.0
  %v518 = vadd.f32 %v274, %v517
  %519 = vadd.xlane.f32.xlu0 %v518
  %v520 = vpop.xlane.xlu0 %519
  %v521 = vsel %vm320, %v277, 0.0
  %v522 = vadd.f32 %v276, %v521
  %523 = vadd.xlane.f32.xlu0 %v522
  %v524 = vpop.xlane.xlu0 %523
  %v525 = vsel %vm320, %v279, 0.0
  %v526 = vadd.f32 %v278, %v525
  %527 = vadd.xlane.f32.xlu0 %v526
  %v528 = vpop.xlane.xlu0 %527
  %v529 = vsel %vm320, %v281, 0.0
  %v530 = vadd.f32 %v280, %v529
  %531 = vadd.xlane.f32.xlu0 %v530
  %v532 = vpop.xlane.xlu0 %531
  %v533 = vsel %vm320, %v283, 0.0
  %v534 = vadd.f32 %v282, %v533
  %535 = vadd.xlane.f32.xlu0 %v534
  %v536 = vpop.xlane.xlu0 %535
  %v537 = vsel %vm320, %v285, 0.0
  %v538 = vadd.f32 %v284, %v537
  %539 = vadd.xlane.f32.xlu0 %v538
  %v540 = vpop.xlane.xlu0 %539
  %v541 = vsel %vm320, %v287, 0.0
  %v542 = vadd.f32 %v286, %v541
  %543 = vadd.xlane.f32.xlu0 %v542
  %v544 = vpop.xlane.xlu0 %543
  %v545 = vsel %vm320, %v289, 0.0
  %v546 = vadd.f32 %v288, %v545
  %547 = vadd.xlane.f32.xlu0 %v546
  %v548 = vpop.xlane.xlu0 %547
  %v549 = vsel %vm320, %v291, 0.0
  %v550 = vadd.f32 %v290, %v549
  %551 = vadd.xlane.f32.xlu0 %v550
  %v552 = vpop.xlane.xlu0 %551
  %v553 = vsel %vm320, %v293, 0.0
  %v554 = vadd.f32 %v292, %v553
  %555 = vadd.xlane.f32.xlu0 %v554
  %v556 = vpop.xlane.xlu0 %555
  %v557 = vsel %vm320, %v295, 0.0
  %v558 = vadd.f32 %v294, %v557
  %559 = vadd.xlane.f32.xlu0 %v558
  %v560 = vpop.xlane.xlu0 %559
  %v561 = vsel %vm320, %v297, 0.0
  %v562 = vadd.f32 %v296, %v561
  %563 = vadd.xlane.f32.xlu0 %v562
  %v564 = vpop.xlane.xlu0 %563
  %v565 = vsel %vm320, %v299, 0.0
  %v566 = vadd.f32 %v298, %v565
  %567 = vadd.xlane.f32.xlu0 %v566
  %v568 = vpop.xlane.xlu0 %567
  %v569 = vsel %vm320, %v301, 0.0
  %v570 = vadd.f32 %v300, %v569
  %571 = vadd.xlane.f32.xlu0 %v570
  %v572 = vpop.xlane.xlu0 %571
  %v573 = vsel %vm320, %v303, 0.0
  %v574 = vadd.f32 %v302, %v573
  %575 = vadd.xlane.f32.xlu0 %v574
  %v576 = vpop.xlane.xlu0 %575
  %v577 = vsel %vm320, %v305, 0.0
  %v578 = vadd.f32 %v304, %v577
  %579 = vadd.xlane.f32.xlu0 %v578
  %v580 = vpop.xlane.xlu0 %579
  %v581 = vsel %vm320, %v307, 0.0
  %v582 = vadd.f32 %v306, %v581
  %583 = vadd.xlane.f32.xlu0 %v582
  %v584 = vpop.xlane.xlu0 %583
  %v585 = vsel %vm320, %v309, 0.0
  %v586 = vadd.f32 %v308, %v585
  %587 = vadd.xlane.f32.xlu0 %v586
  %v588 = vpop.xlane.xlu0 %587
  %v589 = vsel %vm320, %v311, 0.0
  %v590 = vadd.f32 %v310, %v589
  %591 = vadd.xlane.f32.xlu0 %v590
  %v592 = vpop.xlane.xlu0 %591
  %v593 = vsel %vm320, %v313, 0.0
  %v594 = vadd.f32 %v312, %v593
  %595 = vadd.xlane.f32.xlu0 %v594
  %v596 = vpop.xlane.xlu0 %595
  %v597 = vsel %vm320, %v315, 0.0
  %v598 = vadd.f32 %v314, %v597
  %599 = vadd.xlane.f32.xlu0 %v598
  %v600 = vpop.xlane.xlu0 %599
  %v601 = vsel %vm320, %v317, 0.0
  %v602 = vadd.f32 %v316, %v601
  %603 = vadd.xlane.f32.xlu0 %v602
  %v604 = vpop.xlane.xlu0 %603
  %v605 = vsel %vm320, %v319, 0.0
  %v606 = vadd.f32 %v318, %v605
  %607 = vadd.xlane.f32.xlu0 %v606
  %v608 = vpop.xlane.xlu0 %607
  %v609 = vld [vmem:[%s3] sm:$0xff]
  %v610 = vld [vmem:[%s3 + $0x8] sm:$0xff]
  %v611 = vld [vmem:[%s3 + $0x10] sm:$0xff]
  %v612 = vld [vmem:[%s3 + $0x18] sm:$0xff]
  %v613 = vld [vmem:[%s3 + $0x20] sm:$0xff]
  %v614 = vld [vmem:[%s3 + $0x28] sm:$0xff]
  %v615 = vld [vmem:[%s3 + $0x30] sm:$0xff]
  %v616 = vld [vmem:[%s3 + $0x38] sm:$0xff]
  %v617 = vld [vmem:[%s3 + $0x40] sm:$0xff]
  %v618 = vld [vmem:[%s3 + $0x48] sm:$0xff]
  %v619 = vld [vmem:[%s3 + $0x50] sm:$0xff]
  %v620 = vld [vmem:[%s3 + $0x58] sm:$0xff]
  %v621 = vld [vmem:[%s3 + $0x60] sm:$0xff]
  %v622 = vld [vmem:[%s3 + $0x68] sm:$0xff]
  %v623 = vld [vmem:[%s3 + $0x70] sm:$0xff]
  %v624 = vld [vmem:[%s3 + $0x78] sm:$0xff]
  %v625 = vld [vmem:[%s3 + $0x80] sm:$0xff]
  %v626 = vld [vmem:[%s3 + $0x88] sm:$0xff]
  %v627 = vld [vmem:[%s3 + $0x90] sm:$0xff]
  %v628 = vld [vmem:[%s3 + $0x98] sm:$0xff]
  %v629 = vld [vmem:[%s3 + $0xa0] sm:$0xff]
  %v630 = vld [vmem:[%s3 + $0xa8] sm:$0xff]
  %v631 = vld [vmem:[%s3 + $0xb0] sm:$0xff]
  %v632 = vld [vmem:[%s3 + $0xb8] sm:$0xff]
  %v633 = vld [vmem:[%s3 + $0xc0] sm:$0xff]
  %v634 = vld [vmem:[%s3 + $0xc8] sm:$0xff]
  %v635 = vld [vmem:[%s3 + $0xd0] sm:$0xff]
  %v636 = vld [vmem:[%s3 + $0xd8] sm:$0xff]
  %v637 = vld [vmem:[%s3 + $0xe0] sm:$0xff]
  %v638 = vld [vmem:[%s3 + $0xe8] sm:$0xff]
  %v639 = vld [vmem:[%s3 + $0xf0] sm:$0xff]
  %v640 = vld [vmem:[%s3 + $0xf8] sm:$0xff]
  %v641 = vld [vmem:[%s3 + $0x100] sm:$0xff]
  %v642 = vld [vmem:[%s3 + $0x108] sm:$0xff]
  %v643 = vld [vmem:[%s3 + $0x110] sm:$0xff]
  %v644 = vld [vmem:[%s3 + $0x118] sm:$0xff]
  %v645 = vld [vmem:[%s3 + $0x120] sm:$0xff]
  %v646 = vld [vmem:[%s3 + $0x128] sm:$0xff]
  %v647 = vld [vmem:[%s3 + $0x130] sm:$0xff]
  %v648 = vld [vmem:[%s3 + $0x138] sm:$0xff]
  %v649 = vld [vmem:[%s3 + $0x140] sm:$0xff]
  %v650 = vld [vmem:[%s3 + $0x148] sm:$0xff]
  %v651 = vld [vmem:[%s3 + $0x150] sm:$0xff]
  %v652 = vld [vmem:[%s3 + $0x158] sm:$0xff]
  %v653 = vld [vmem:[%s3 + $0x160] sm:$0xff]
  %v654 = vld [vmem:[%s3 + $0x168] sm:$0xff]
  %v655 = vld [vmem:[%s3 + $0x170] sm:$0xff]
  %v656 = vld [vmem:[%s3 + $0x178] sm:$0xff]
  %v657 = vld [vmem:[%s3 + $0x180] sm:$0xff]
  %v658 = vld [vmem:[%s3 + $0x188] sm:$0xff]
  %v659 = vld [vmem:[%s3 + $0x190] sm:$0xff]
  %v660 = vld [vmem:[%s3 + $0x198] sm:$0xff]
  %v661 = vld [vmem:[%s3 + $0x1a0] sm:$0xff]
  %v662 = vld [vmem:[%s3 + $0x1a8] sm:$0xff]
  %v663 = vld [vmem:[%s3 + $0x1b0] sm:$0xff]
  %v664 = vld [vmem:[%s3 + $0x1b8] sm:$0xff]
  %v665 = vld [vmem:[%s3 + $0x1c0] sm:$0xff]
  %v666 = vld [vmem:[%s3 + $0x1c8] sm:$0xff]
  %v667 = vld [vmem:[%s3 + $0x1d0] sm:$0xff]
  %v668 = vld [vmem:[%s3 + $0x1d8] sm:$0xff]
  %v669 = vld [vmem:[%s3 + $0x1e0] sm:$0xff]
  %v670 = vld [vmem:[%s3 + $0x1e8] sm:$0xff]
  %v671 = vld [vmem:[%s3 + $0x1f0] sm:$0xff]
  %v672 = vld [vmem:[%s3 + $0x1f8] sm:$0xff]
  %v673 = vld [vmem:[%s3 + $0x200] sm:$0xff]
  %v674 = vld [vmem:[%s3 + $0x208] sm:$0xff]
  %v675 = vld [vmem:[%s3 + $0x210] sm:$0xff]
  %v676 = vld [vmem:[%s3 + $0x218] sm:$0xff]
  %v677 = vld [vmem:[%s3 + $0x220] sm:$0xff]
  %v678 = vld [vmem:[%s3 + $0x228] sm:$0xff]
  %v679 = vld [vmem:[%s3 + $0x230] sm:$0xff]
  %v680 = vld [vmem:[%s3 + $0x238] sm:$0xff]
  %v681 = vadd.f32 %v324, %v609
  %v682 = vadd.f32 %v328, %v610
  %v683 = vadd.f32 %v332, %v611
  %v684 = vadd.f32 %v336, %v612
  %v685 = vadd.f32 %v340, %v613
  %v686 = vadd.f32 %v344, %v614
  %v687 = vadd.f32 %v348, %v615
  %v688 = vadd.f32 %v352, %v616
  %v689 = vadd.f32 %v356, %v617
  %v690 = vadd.f32 %v360, %v618
  %v691 = vadd.f32 %v364, %v619
  %v692 = vadd.f32 %v368, %v620
  %v693 = vadd.f32 %v372, %v621
  %v694 = vadd.f32 %v376, %v622
  %v695 = vadd.f32 %v380, %v623
  %v696 = vadd.f32 %v384, %v624
  %v697 = vadd.f32 %v388, %v625
  %v698 = vadd.f32 %v392, %v626
  %v699 = vadd.f32 %v396, %v627
  %v700 = vadd.f32 %v400, %v628
  %v701 = vadd.f32 %v404, %v629
  %v702 = vadd.f32 %v408, %v630
  %v703 = vadd.f32 %v412, %v631
  %v704 = vadd.f32 %v416, %v632
  %v705 = vadd.f32 %v420, %v633
  %v706 = vadd.f32 %v424, %v634
  %v707 = vadd.f32 %v428, %v635
  %v708 = vadd.f32 %v432, %v636
  %v709 = vadd.f32 %v436, %v637
  %v710 = vadd.f32 %v440, %v638
  %v711 = vadd.f32 %v444, %v639
  %v712 = vadd.f32 %v448, %v640
  %v713 = vadd.f32 %v452, %v641
  %v714 = vadd.f32 %v456, %v642
  %v715 = vadd.f32 %v460, %v643
  %v716 = vadd.f32 %v464, %v644
  %v717 = vadd.f32 %v468, %v645
  %v718 = vadd.f32 %v472, %v646
  %v719 = vadd.f32 %v476, %v647
  %v720 = vadd.f32 %v480, %v648
  %v721 = vadd.f32 %v484, %v649
  %v722 = vadd.f32 %v488, %v650
  %v723 = vadd.f32 %v492, %v651
  %v724 = vadd.f32 %v496, %v652
  %v725 = vadd.f32 %v500, %v653
  %v726 = vadd.f32 %v504, %v654
  %v727 = vadd.f32 %v508, %v655
  %v728 = vadd.f32 %v512, %v656
  %v729 = vadd.f32 %v516, %v657
  %v730 = vadd.f32 %v520, %v658
  %v731 = vadd.f32 %v524, %v659
  %v732 = vadd.f32 %v528, %v660
  %v733 = vadd.f32 %v532, %v661
  %v734 = vadd.f32 %v536, %v662
  %v735 = vadd.f32 %v540, %v663
  %v736 = vadd.f32 %v544, %v664
  %v737 = vadd.f32 %v548, %v665
  %v738 = vadd.f32 %v552, %v666
  %v739 = vadd.f32 %v556, %v667
  %v740 = vadd.f32 %v560, %v668
  %v741 = vadd.f32 %v564, %v669
  %v742 = vadd.f32 %v568, %v670
  %v743 = vadd.f32 %v572, %v671
  %v744 = vadd.f32 %v576, %v672
  %v745 = vadd.f32 %v580, %v673
  %v746 = vadd.f32 %v584, %v674
  %v747 = vadd.f32 %v588, %v675
  %v748 = vadd.f32 %v592, %v676
  %v749 = vadd.f32 %v596, %v677
  %v750 = vadd.f32 %v600, %v678
  %v751 = vadd.f32 %v604, %v679
  %v752 = vadd.f32 %v608, %v680
  %v753 = vmul.f32 %v681, 0.16666667
  %v754 = vmul.f32 %v682, 0.16666667
  %v755 = vmul.f32 %v683, 0.16666667
  %v756 = vmul.f32 %v684, 0.16666667
  %v757 = vmul.f32 %v685, 0.16666667
  %v758 = vmul.f32 %v686, 0.16666667
  %v759 = vmul.f32 %v687, 0.16666667
  %v760 = vmul.f32 %v688, 0.16666667
  %v761 = vmul.f32 %v689, 0.16666667
  %v762 = vmul.f32 %v690, 0.16666667
  %v763 = vmul.f32 %v691, 0.16666667
  %v764 = vmul.f32 %v692, 0.16666667
  %v765 = vmul.f32 %v693, 0.16666667
  %v766 = vmul.f32 %v694, 0.16666667
  %v767 = vmul.f32 %v695, 0.16666667
  %v768 = vmul.f32 %v696, 0.16666667
  %v769 = vmul.f32 %v697, 0.16666667
  %v770 = vmul.f32 %v698, 0.16666667
  %v771 = vmul.f32 %v699, 0.16666667
  %v772 = vmul.f32 %v700, 0.16666667
  %v773 = vmul.f32 %v701, 0.16666667
  %v774 = vmul.f32 %v702, 0.16666667
  %v775 = vmul.f32 %v703, 0.16666667
  %v776 = vmul.f32 %v704, 0.16666667
  %v777 = vmul.f32 %v705, 0.16666667
  %v778 = vmul.f32 %v706, 0.16666667
  %v779 = vmul.f32 %v707, 0.16666667
  %v780 = vmul.f32 %v708, 0.16666667
  %v781 = vmul.f32 %v709, 0.16666667
  %v782 = vmul.f32 %v710, 0.16666667
  %v783 = vmul.f32 %v711, 0.16666667
  %v784 = vmul.f32 %v712, 0.16666667
  %v785 = vmul.f32 %v713, 0.16666667
  %v786 = vmul.f32 %v714, 0.16666667
  %v787 = vmul.f32 %v715, 0.16666667
  %v788 = vmul.f32 %v716, 0.16666667
  %v789 = vmul.f32 %v717, 0.16666667
  %v790 = vmul.f32 %v718, 0.16666667
  %v791 = vmul.f32 %v719, 0.16666667
  %v792 = vmul.f32 %v720, 0.16666667
  %v793 = vmul.f32 %v721, 0.16666667
  %v794 = vmul.f32 %v722, 0.16666667
  %v795 = vmul.f32 %v723, 0.16666667
  %v796 = vmul.f32 %v724, 0.16666667
  %v797 = vmul.f32 %v725, 0.16666667
  %v798 = vmul.f32 %v726, 0.16666667
  %v799 = vmul.f32 %v727, 0.16666667
  %v800 = vmul.f32 %v728, 0.16666667
  %v801 = vmul.f32 %v729, 0.16666667
  %v802 = vmul.f32 %v730, 0.16666667
  %v803 = vmul.f32 %v731, 0.16666667
  %v804 = vmul.f32 %v732, 0.16666667
  %v805 = vmul.f32 %v733, 0.16666667
  %v806 = vmul.f32 %v734, 0.16666667
  %v807 = vmul.f32 %v735, 0.16666667
  %v808 = vmul.f32 %v736, 0.16666667
  %v809 = vmul.f32 %v737, 0.16666667
  %v810 = vmul.f32 %v738, 0.16666667
  %v811 = vmul.f32 %v739, 0.16666667
  %v812 = vmul.f32 %v740, 0.16666667
  %v813 = vmul.f32 %v741, 0.16666667
  %v814 = vmul.f32 %v742, 0.16666667
  %v815 = vmul.f32 %v743, 0.16666667
  %v816 = vmul.f32 %v744, 0.16666667
  %v817 = vmul.f32 %v745, 0.16666667
  %v818 = vmul.f32 %v746, 0.16666667
  %v819 = vmul.f32 %v747, 0.16666667
  %v820 = vmul.f32 %v748, 0.16666667
  %v821 = vmul.f32 %v749, 0.16666667
  %v822 = vmul.f32 %v750, 0.16666667
  %v823 = vmul.f32 %v751, 0.16666667
  %v824 = vmul.f32 %v752, 0.16666667
  %v825 = vadd.f32 %v753, 0.5
  %v826 = vadd.f32 %v754, 0.5
  %v827 = vadd.f32 %v755, 0.5
  %v828 = vadd.f32 %v756, 0.5
  %v829 = vadd.f32 %v757, 0.5
  %v830 = vadd.f32 %v758, 0.5
  %v831 = vadd.f32 %v759, 0.5
  %v832 = vadd.f32 %v760, 0.5
  %v833 = vadd.f32 %v761, 0.5
  %v834 = vadd.f32 %v762, 0.5
  %v835 = vadd.f32 %v763, 0.5
  %v836 = vadd.f32 %v764, 0.5
  %v837 = vadd.f32 %v765, 0.5
  %v838 = vadd.f32 %v766, 0.5
  %v839 = vadd.f32 %v767, 0.5
  %v840 = vadd.f32 %v768, 0.5
  %v841 = vadd.f32 %v769, 0.5
  %v842 = vadd.f32 %v770, 0.5
  %v843 = vadd.f32 %v771, 0.5
  %v844 = vadd.f32 %v772, 0.5
  %v845 = vadd.f32 %v773, 0.5
  %v846 = vadd.f32 %v774, 0.5
  %v847 = vadd.f32 %v775, 0.5
  %v848 = vadd.f32 %v776, 0.5
  %v849 = vadd.f32 %v777, 0.5
  %v850 = vadd.f32 %v778, 0.5
  %v851 = vadd.f32 %v779, 0.5
  %v852 = vadd.f32 %v780, 0.5
  %v853 = vadd.f32 %v781, 0.5
  %v854 = vadd.f32 %v782, 0.5
  %v855 = vadd.f32 %v783, 0.5
  %v856 = vadd.f32 %v784, 0.5
  %v857 = vadd.f32 %v785, 0.5
  %v858 = vadd.f32 %v786, 0.5
  %v859 = vadd.f32 %v787, 0.5
  %v860 = vadd.f32 %v788, 0.5
  %v861 = vadd.f32 %v789, 0.5
  %v862 = vadd.f32 %v790, 0.5
  %v863 = vadd.f32 %v791, 0.5
  %v864 = vadd.f32 %v792, 0.5
  %v865 = vadd.f32 %v793, 0.5
  %v866 = vadd.f32 %v794, 0.5
  %v867 = vadd.f32 %v795, 0.5
  %v868 = vadd.f32 %v796, 0.5
  %v869 = vadd.f32 %v797, 0.5
  %v870 = vadd.f32 %v798, 0.5
  %v871 = vadd.f32 %v799, 0.5
  %v872 = vadd.f32 %v800, 0.5
  %v873 = vadd.f32 %v801, 0.5
  %v874 = vadd.f32 %v802, 0.5
  %v875 = vadd.f32 %v803, 0.5
  %v876 = vadd.f32 %v804, 0.5
  %v877 = vadd.f32 %v805, 0.5
  %v878 = vadd.f32 %v806, 0.5
  %v879 = vadd.f32 %v807, 0.5
  %v880 = vadd.f32 %v808, 0.5
  %v881 = vadd.f32 %v809, 0.5
  %v882 = vadd.f32 %v810, 0.5
  %v883 = vadd.f32 %v811, 0.5
  %v884 = vadd.f32 %v812, 0.5
  %v885 = vadd.f32 %v813, 0.5
  %v886 = vadd.f32 %v814, 0.5
  %v887 = vadd.f32 %v815, 0.5
  %v888 = vadd.f32 %v816, 0.5
  %v889 = vadd.f32 %v817, 0.5
  %v890 = vadd.f32 %v818, 0.5
  %v891 = vadd.f32 %v819, 0.5
  %v892 = vadd.f32 %v820, 0.5
  %v893 = vadd.f32 %v821, 0.5
  %v894 = vadd.f32 %v822, 0.5
  %v895 = vadd.f32 %v823, 0.5
  %v896 = vadd.f32 %v824, 0.5
  %v897 = vmax.f32 %v825, 0.0
  %v898 = vmax.f32 %v826, 0.0
  %v899 = vmax.f32 %v827, 0.0
  %v900 = vmax.f32 %v828, 0.0
  %v901 = vmax.f32 %v829, 0.0
  %v902 = vmax.f32 %v830, 0.0
  %v903 = vmax.f32 %v831, 0.0
  %v904 = vmax.f32 %v832, 0.0
  %v905 = vmax.f32 %v833, 0.0
  %v906 = vmax.f32 %v834, 0.0
  %v907 = vmax.f32 %v835, 0.0
  %v908 = vmax.f32 %v836, 0.0
  %v909 = vmax.f32 %v837, 0.0
  %v910 = vmax.f32 %v838, 0.0
  %v911 = vmax.f32 %v839, 0.0
  %v912 = vmax.f32 %v840, 0.0
  %v913 = vmax.f32 %v841, 0.0
  %v914 = vmax.f32 %v842, 0.0
  %v915 = vmax.f32 %v843, 0.0
  %v916 = vmax.f32 %v844, 0.0
  %v917 = vmax.f32 %v845, 0.0
  %v918 = vmax.f32 %v846, 0.0
  %v919 = vmax.f32 %v847, 0.0
  %v920 = vmax.f32 %v848, 0.0
  %v921 = vmax.f32 %v849, 0.0
  %v922 = vmax.f32 %v850, 0.0
  %v923 = vmax.f32 %v851, 0.0
  %v924 = vmax.f32 %v852, 0.0
  %v925 = vmax.f32 %v853, 0.0
  %v926 = vmax.f32 %v854, 0.0
  %v927 = vmax.f32 %v855, 0.0
  %v928 = vmax.f32 %v856, 0.0
  %v929 = vmax.f32 %v857, 0.0
  %v930 = vmax.f32 %v858, 0.0
  %v931 = vmax.f32 %v859, 0.0
  %v932 = vmax.f32 %v860, 0.0
  %v933 = vmax.f32 %v861, 0.0
  %v934 = vmax.f32 %v862, 0.0
  %v935 = vmax.f32 %v863, 0.0
  %v936 = vmax.f32 %v864, 0.0
  %v937 = vmax.f32 %v865, 0.0
  %v938 = vmax.f32 %v866, 0.0
  %v939 = vmax.f32 %v867, 0.0
  %v940 = vmax.f32 %v868, 0.0
  %v941 = vmax.f32 %v869, 0.0
  %v942 = vmax.f32 %v870, 0.0
  %v943 = vmax.f32 %v871, 0.0
  %v944 = vmax.f32 %v872, 0.0
  %v945 = vmax.f32 %v873, 0.0
  %v946 = vmax.f32 %v874, 0.0
  %v947 = vmax.f32 %v875, 0.0
  %v948 = vmax.f32 %v876, 0.0
  %v949 = vmax.f32 %v877, 0.0
  %v950 = vmax.f32 %v878, 0.0
  %v951 = vmax.f32 %v879, 0.0
  %v952 = vmax.f32 %v880, 0.0
  %v953 = vmax.f32 %v881, 0.0
  %v954 = vmax.f32 %v882, 0.0
  %v955 = vmax.f32 %v883, 0.0
  %v956 = vmax.f32 %v884, 0.0
  %v957 = vmax.f32 %v885, 0.0
  %v958 = vmax.f32 %v886, 0.0
  %v959 = vmax.f32 %v887, 0.0
  %v960 = vmax.f32 %v888, 0.0
  %v961 = vmax.f32 %v889, 0.0
  %v962 = vmax.f32 %v890, 0.0
  %v963 = vmax.f32 %v891, 0.0
  %v964 = vmax.f32 %v892, 0.0
  %v965 = vmax.f32 %v893, 0.0
  %v966 = vmax.f32 %v894, 0.0
  %v967 = vmax.f32 %v895, 0.0
  %v968 = vmax.f32 %v896, 0.0
  %v969 = vmin.f32 %v897, 1.0
  %v970 = vmin.f32 %v898, 1.0
  %v971 = vmin.f32 %v899, 1.0
  %v972 = vmin.f32 %v900, 1.0
  %v973 = vmin.f32 %v901, 1.0
  %v974 = vmin.f32 %v902, 1.0
  %v975 = vmin.f32 %v903, 1.0
  %v976 = vmin.f32 %v904, 1.0
  %v977 = vmin.f32 %v905, 1.0
  %v978 = vmin.f32 %v906, 1.0
  %v979 = vmin.f32 %v907, 1.0
  %v980 = vmin.f32 %v908, 1.0
  %v981 = vmin.f32 %v909, 1.0
  %v982 = vmin.f32 %v910, 1.0
  %v983 = vmin.f32 %v911, 1.0
  %v984 = vmin.f32 %v912, 1.0
  %v985 = vmin.f32 %v913, 1.0
  %v986 = vmin.f32 %v914, 1.0
  %v987 = vmin.f32 %v915, 1.0
  %v988 = vmin.f32 %v916, 1.0
  %v989 = vmin.f32 %v917, 1.0
  %v990 = vmin.f32 %v918, 1.0
  %v991 = vmin.f32 %v919, 1.0
  %v992 = vmin.f32 %v920, 1.0
  %v993 = vmin.f32 %v921, 1.0
  %v994 = vmin.f32 %v922, 1.0
  %v995 = vmin.f32 %v923, 1.0
  %v996 = vmin.f32 %v924, 1.0
  %v997 = vmin.f32 %v925, 1.0
  %v998 = vmin.f32 %v926, 1.0
  %v999 = vmin.f32 %v927, 1.0
  %v1000 = vmin.f32 %v928, 1.0
  %v1001 = vmin.f32 %v929, 1.0
  %v1002 = vmin.f32 %v930, 1.0
  %v1003 = vmin.f32 %v931, 1.0
  %v1004 = vmin.f32 %v932, 1.0
  %v1005 = vmin.f32 %v933, 1.0
  %v1006 = vmin.f32 %v934, 1.0
  %v1007 = vmin.f32 %v935, 1.0
  %v1008 = vmin.f32 %v936, 1.0
  %v1009 = vmin.f32 %v937, 1.0
  %v1010 = vmin.f32 %v938, 1.0
  %v1011 = vmin.f32 %v939, 1.0
  %v1012 = vmin.f32 %v940, 1.0
  %v1013 = vmin.f32 %v941, 1.0
  %v1014 = vmin.f32 %v942, 1.0
  %v1015 = vmin.f32 %v943, 1.0
  %v1016 = vmin.f32 %v944, 1.0
  %v1017 = vmin.f32 %v945, 1.0
  %v1018 = vmin.f32 %v946, 1.0
  %v1019 = vmin.f32 %v947, 1.0
  %v1020 = vmin.f32 %v948, 1.0
  %v1021 = vmin.f32 %v949, 1.0
  %v1022 = vmin.f32 %v950, 1.0
  %v1023 = vmin.f32 %v951, 1.0
  %v1024 = vmin.f32 %v952, 1.0
  %v1025 = vmin.f32 %v953, 1.0
  %v1026 = vmin.f32 %v954, 1.0
  %v1027 = vmin.f32 %v955, 1.0
  %v1028 = vmin.f32 %v956, 1.0
  %v1029 = vmin.f32 %v957, 1.0
  %v1030 = vmin.f32 %v958, 1.0
  %v1031 = vmin.f32 %v959, 1.0
  %v1032 = vmin.f32 %v960, 1.0
  %v1033 = vmin.f32 %v961, 1.0
  %v1034 = vmin.f32 %v962, 1.0
  %v1035 = vmin.f32 %v963, 1.0
  %v1036 = vmin.f32 %v964, 1.0
  %v1037 = vmin.f32 %v965, 1.0
  %v1038 = vmin.f32 %v966, 1.0
  %v1039 = vmin.f32 %v967, 1.0
  %v1040 = vmin.f32 %v968, 1.0
  %v1041 = vld [vmem:[%s1] sm:$0xff]
  %v1042 = vld [vmem:[%s1 + $0x8] sm:$0xff]
  %v1043 = vld [vmem:[%s1 + $0x10] sm:$0xff]
  %v1044 = vld [vmem:[%s1 + $0x18] sm:$0xff]
  %v1045 = vld [vmem:[%s1 + $0x20] sm:$0xff]
  %v1046 = vld [vmem:[%s1 + $0x28] sm:$0xff]
  %v1047 = vld [vmem:[%s1 + $0x30] sm:$0xff]
  %v1048 = vld [vmem:[%s1 + $0x38] sm:$0xff]
  %v1049 = vld [vmem:[%s1 + $0x40] sm:$0xff]
  %v1050 = vld [vmem:[%s1 + $0x48] sm:$0xff]
  %v1051 = vld [vmem:[%s1 + $0x50] sm:$0xff]
  %v1052 = vld [vmem:[%s1 + $0x58] sm:$0xff]
  %v1053 = vld [vmem:[%s1 + $0x60] sm:$0xff]
  %v1054 = vld [vmem:[%s1 + $0x68] sm:$0xff]
  %v1055 = vld [vmem:[%s1 + $0x70] sm:$0xff]
  %v1056 = vld [vmem:[%s1 + $0x78] sm:$0xff]
  %v1057 = vld [vmem:[%s1 + $0x80] sm:$0xff]
  %v1058 = vld [vmem:[%s1 + $0x88] sm:$0xff]
  %v1059 = vld [vmem:[%s1 + $0x90] sm:$0xff]
  %v1060 = vld [vmem:[%s1 + $0x98] sm:$0xff]
  %v1061 = vld [vmem:[%s1 + $0xa0] sm:$0xff]
  %v1062 = vld [vmem:[%s1 + $0xa8] sm:$0xff]
  %v1063 = vld [vmem:[%s1 + $0xb0] sm:$0xff]
  %v1064 = vld [vmem:[%s1 + $0xb8] sm:$0xff]
  %v1065 = vld [vmem:[%s1 + $0xc0] sm:$0xff]
  %v1066 = vld [vmem:[%s1 + $0xc8] sm:$0xff]
  %v1067 = vld [vmem:[%s1 + $0xd0] sm:$0xff]
  %v1068 = vld [vmem:[%s1 + $0xd8] sm:$0xff]
  %v1069 = vld [vmem:[%s1 + $0xe0] sm:$0xff]
  %v1070 = vld [vmem:[%s1 + $0xe8] sm:$0xff]
  %v1071 = vld [vmem:[%s1 + $0xf0] sm:$0xff]
  %v1072 = vld [vmem:[%s1 + $0xf8] sm:$0xff]
  %v1073 = vld [vmem:[%s1 + $0x100] sm:$0xff]
  %v1074 = vld [vmem:[%s1 + $0x108] sm:$0xff]
  %v1075 = vld [vmem:[%s1 + $0x110] sm:$0xff]
  %v1076 = vld [vmem:[%s1 + $0x118] sm:$0xff]
  %v1077 = vld [vmem:[%s1 + $0x120] sm:$0xff]
  %v1078 = vld [vmem:[%s1 + $0x128] sm:$0xff]
  %v1079 = vld [vmem:[%s1 + $0x130] sm:$0xff]
  %v1080 = vld [vmem:[%s1 + $0x138] sm:$0xff]
  %v1081 = vld [vmem:[%s1 + $0x140] sm:$0xff]
  %v1082 = vld [vmem:[%s1 + $0x148] sm:$0xff]
  %v1083 = vld [vmem:[%s1 + $0x150] sm:$0xff]
  %v1084 = vld [vmem:[%s1 + $0x158] sm:$0xff]
  %v1085 = vld [vmem:[%s1 + $0x160] sm:$0xff]
  %v1086 = vld [vmem:[%s1 + $0x168] sm:$0xff]
  %v1087 = vld [vmem:[%s1 + $0x170] sm:$0xff]
  %v1088 = vld [vmem:[%s1 + $0x178] sm:$0xff]
  %v1089 = vld [vmem:[%s1 + $0x180] sm:$0xff]
  %v1090 = vld [vmem:[%s1 + $0x188] sm:$0xff]
  %v1091 = vld [vmem:[%s1 + $0x190] sm:$0xff]
  %v1092 = vld [vmem:[%s1 + $0x198] sm:$0xff]
  %v1093 = vld [vmem:[%s1 + $0x1a0] sm:$0xff]
  %v1094 = vld [vmem:[%s1 + $0x1a8] sm:$0xff]
  %v1095 = vld [vmem:[%s1 + $0x1b0] sm:$0xff]
  %v1096 = vld [vmem:[%s1 + $0x1b8] sm:$0xff]
  %v1097 = vld [vmem:[%s1 + $0x1c0] sm:$0xff]
  %v1098 = vld [vmem:[%s1 + $0x1c8] sm:$0xff]
  %v1099 = vld [vmem:[%s1 + $0x1d0] sm:$0xff]
  %v1100 = vld [vmem:[%s1 + $0x1d8] sm:$0xff]
  %v1101 = vld [vmem:[%s1 + $0x1e0] sm:$0xff]
  %v1102 = vld [vmem:[%s1 + $0x1e8] sm:$0xff]
  %v1103 = vld [vmem:[%s1 + $0x1f0] sm:$0xff]
  %v1104 = vld [vmem:[%s1 + $0x1f8] sm:$0xff]
  %v1105 = vld [vmem:[%s1 + $0x200] sm:$0xff]
  %v1106 = vld [vmem:[%s1 + $0x208] sm:$0xff]
  %v1107 = vld [vmem:[%s1 + $0x210] sm:$0xff]
  %v1108 = vld [vmem:[%s1 + $0x218] sm:$0xff]
  %v1109 = vld [vmem:[%s1 + $0x220] sm:$0xff]
  %v1110 = vld [vmem:[%s1 + $0x228] sm:$0xff]
  %v1111 = vld [vmem:[%s1 + $0x230] sm:$0xff]
  %v1112 = vld [vmem:[%s1 + $0x238] sm:$0xff]
  %1114 = vset.pattern.permute.xlu0 0
  %1115 = vperm.xlu0 %1114, %v969
  %v1116 = vpop.permute.xlu0 %1115
  %1119 = vset.pattern.permute.xlu0 0
  %1120 = vperm.xlu0 %1119, %v970
  %v1121 = vpop.permute.xlu0 %1120
  %1124 = vset.pattern.permute.xlu0 0
  %1125 = vperm.xlu0 %1124, %v971
  %v1126 = vpop.permute.xlu0 %1125
  %1129 = vset.pattern.permute.xlu0 0
  %1130 = vperm.xlu0 %1129, %v972
  %v1131 = vpop.permute.xlu0 %1130
  %1134 = vset.pattern.permute.xlu0 0
  %1135 = vperm.xlu0 %1134, %v973
  %v1136 = vpop.permute.xlu0 %1135
  %1139 = vset.pattern.permute.xlu0 0
  %1140 = vperm.xlu0 %1139, %v974
  %v1141 = vpop.permute.xlu0 %1140
  %1144 = vset.pattern.permute.xlu0 0
  %1145 = vperm.xlu0 %1144, %v975
  %v1146 = vpop.permute.xlu0 %1145
  %1149 = vset.pattern.permute.xlu0 0
  %1150 = vperm.xlu0 %1149, %v976
  %v1151 = vpop.permute.xlu0 %1150
  %1154 = vset.pattern.permute.xlu0 0
  %1155 = vperm.xlu0 %1154, %v977
  %v1156 = vpop.permute.xlu0 %1155
  %1159 = vset.pattern.permute.xlu0 0
  %1160 = vperm.xlu0 %1159, %v978
  %v1161 = vpop.permute.xlu0 %1160
  %1164 = vset.pattern.permute.xlu0 0
  %1165 = vperm.xlu0 %1164, %v979
  %v1166 = vpop.permute.xlu0 %1165
  %1169 = vset.pattern.permute.xlu0 0
  %1170 = vperm.xlu0 %1169, %v980
  %v1171 = vpop.permute.xlu0 %1170
  %1174 = vset.pattern.permute.xlu0 0
  %1175 = vperm.xlu0 %1174, %v981
  %v1176 = vpop.permute.xlu0 %1175
  %1179 = vset.pattern.permute.xlu0 0
  %1180 = vperm.xlu0 %1179, %v982
  %v1181 = vpop.permute.xlu0 %1180
  %1184 = vset.pattern.permute.xlu0 0
  %1185 = vperm.xlu0 %1184, %v983
  %v1186 = vpop.permute.xlu0 %1185
  %1189 = vset.pattern.permute.xlu0 0
  %1190 = vperm.xlu0 %1189, %v984
  %v1191 = vpop.permute.xlu0 %1190
  %1194 = vset.pattern.permute.xlu0 0
  %1195 = vperm.xlu0 %1194, %v985
  %v1196 = vpop.permute.xlu0 %1195
  %1199 = vset.pattern.permute.xlu0 0
  %1200 = vperm.xlu0 %1199, %v986
  %v1201 = vpop.permute.xlu0 %1200
  %1204 = vset.pattern.permute.xlu0 0
  %1205 = vperm.xlu0 %1204, %v987
  %v1206 = vpop.permute.xlu0 %1205
  %1209 = vset.pattern.permute.xlu0 0
  %1210 = vperm.xlu0 %1209, %v988
  %v1211 = vpop.permute.xlu0 %1210
  %1214 = vset.pattern.permute.xlu0 0
  %1215 = vperm.xlu0 %1214, %v989
  %v1216 = vpop.permute.xlu0 %1215
  %1219 = vset.pattern.permute.xlu0 0
  %1220 = vperm.xlu0 %1219, %v990
  %v1221 = vpop.permute.xlu0 %1220
  %1224 = vset.pattern.permute.xlu0 0
  %1225 = vperm.xlu0 %1224, %v991
  %v1226 = vpop.permute.xlu0 %1225
  %1229 = vset.pattern.permute.xlu0 0
  %1230 = vperm.xlu0 %1229, %v992
  %v1231 = vpop.permute.xlu0 %1230
  %1234 = vset.pattern.permute.xlu0 0
  %1235 = vperm.xlu0 %1234, %v993
  %v1236 = vpop.permute.xlu0 %1235
  %1239 = vset.pattern.permute.xlu0 0
  %1240 = vperm.xlu0 %1239, %v994
  %v1241 = vpop.permute.xlu0 %1240
  %1244 = vset.pattern.permute.xlu0 0
  %1245 = vperm.xlu0 %1244, %v995
  %v1246 = vpop.permute.xlu0 %1245
  %1249 = vset.pattern.permute.xlu0 0
  %1250 = vperm.xlu0 %1249, %v996
  %v1251 = vpop.permute.xlu0 %1250
  %1254 = vset.pattern.permute.xlu0 0
  %1255 = vperm.xlu0 %1254, %v997
  %v1256 = vpop.permute.xlu0 %1255
  %1259 = vset.pattern.permute.xlu0 0
  %1260 = vperm.xlu0 %1259, %v998
  %v1261 = vpop.permute.xlu0 %1260
  %1264 = vset.pattern.permute.xlu0 0
  %1265 = vperm.xlu0 %1264, %v999
  %v1266 = vpop.permute.xlu0 %1265
  %1269 = vset.pattern.permute.xlu0 0
  %1270 = vperm.xlu0 %1269, %v1000
  %v1271 = vpop.permute.xlu0 %1270
  %1274 = vset.pattern.permute.xlu0 0
  %1275 = vperm.xlu0 %1274, %v1001
  %v1276 = vpop.permute.xlu0 %1275
  %1279 = vset.pattern.permute.xlu0 0
  %1280 = vperm.xlu0 %1279, %v1002
  %v1281 = vpop.permute.xlu0 %1280
  %1284 = vset.pattern.permute.xlu0 0
  %1285 = vperm.xlu0 %1284, %v1003
  %v1286 = vpop.permute.xlu0 %1285
  %1289 = vset.pattern.permute.xlu0 0
  %1290 = vperm.xlu0 %1289, %v1004
  %v1291 = vpop.permute.xlu0 %1290
  %1294 = vset.pattern.permute.xlu0 0
  %1295 = vperm.xlu0 %1294, %v1005
  %v1296 = vpop.permute.xlu0 %1295
  %1299 = vset.pattern.permute.xlu0 0
  %1300 = vperm.xlu0 %1299, %v1006
  %v1301 = vpop.permute.xlu0 %1300
  %1304 = vset.pattern.permute.xlu0 0
  %1305 = vperm.xlu0 %1304, %v1007
  %v1306 = vpop.permute.xlu0 %1305
  %1309 = vset.pattern.permute.xlu0 0
  %1310 = vperm.xlu0 %1309, %v1008
  %v1311 = vpop.permute.xlu0 %1310
  %1314 = vset.pattern.permute.xlu0 0
  %1315 = vperm.xlu0 %1314, %v1009
  %v1316 = vpop.permute.xlu0 %1315
  %1319 = vset.pattern.permute.xlu0 0
  %1320 = vperm.xlu0 %1319, %v1010
  %v1321 = vpop.permute.xlu0 %1320
  %1324 = vset.pattern.permute.xlu0 0
  %1325 = vperm.xlu0 %1324, %v1011
  %v1326 = vpop.permute.xlu0 %1325
  %1329 = vset.pattern.permute.xlu0 0
  %1330 = vperm.xlu0 %1329, %v1012
  %v1331 = vpop.permute.xlu0 %1330
  %1334 = vset.pattern.permute.xlu0 0
  %1335 = vperm.xlu0 %1334, %v1013
  %v1336 = vpop.permute.xlu0 %1335
  %1339 = vset.pattern.permute.xlu0 0
  %1340 = vperm.xlu0 %1339, %v1014
  %v1341 = vpop.permute.xlu0 %1340
  %1344 = vset.pattern.permute.xlu0 0
  %1345 = vperm.xlu0 %1344, %v1015
  %v1346 = vpop.permute.xlu0 %1345
  %1349 = vset.pattern.permute.xlu0 0
  %1350 = vperm.xlu0 %1349, %v1016
  %v1351 = vpop.permute.xlu0 %1350
  %1354 = vset.pattern.permute.xlu0 0
  %1355 = vperm.xlu0 %1354, %v1017
  %v1356 = vpop.permute.xlu0 %1355
  %1359 = vset.pattern.permute.xlu0 0
  %1360 = vperm.xlu0 %1359, %v1018
  %v1361 = vpop.permute.xlu0 %1360
  %1364 = vset.pattern.permute.xlu0 0
  %1365 = vperm.xlu0 %1364, %v1019
  %v1366 = vpop.permute.xlu0 %1365
  %1369 = vset.pattern.permute.xlu0 0
  %1370 = vperm.xlu0 %1369, %v1020
  %v1371 = vpop.permute.xlu0 %1370
  %1374 = vset.pattern.permute.xlu0 0
  %1375 = vperm.xlu0 %1374, %v1021
  %v1376 = vpop.permute.xlu0 %1375
  %1379 = vset.pattern.permute.xlu0 0
  %1380 = vperm.xlu0 %1379, %v1022
  %v1381 = vpop.permute.xlu0 %1380
  %1384 = vset.pattern.permute.xlu0 0
  %1385 = vperm.xlu0 %1384, %v1023
  %v1386 = vpop.permute.xlu0 %1385
  %1389 = vset.pattern.permute.xlu0 0
  %1390 = vperm.xlu0 %1389, %v1024
  %v1391 = vpop.permute.xlu0 %1390
  %1394 = vset.pattern.permute.xlu0 0
  %1395 = vperm.xlu0 %1394, %v1025
  %v1396 = vpop.permute.xlu0 %1395
  %1399 = vset.pattern.permute.xlu0 0
  %1400 = vperm.xlu0 %1399, %v1026
  %v1401 = vpop.permute.xlu0 %1400
  %1404 = vset.pattern.permute.xlu0 0
  %1405 = vperm.xlu0 %1404, %v1027
  %v1406 = vpop.permute.xlu0 %1405
  %1409 = vset.pattern.permute.xlu0 0
  %1410 = vperm.xlu0 %1409, %v1028
  %v1411 = vpop.permute.xlu0 %1410
  %1414 = vset.pattern.permute.xlu0 0
  %1415 = vperm.xlu0 %1414, %v1029
  %v1416 = vpop.permute.xlu0 %1415
  %1419 = vset.pattern.permute.xlu0 0
  %1420 = vperm.xlu0 %1419, %v1030
  %v1421 = vpop.permute.xlu0 %1420
  %1424 = vset.pattern.permute.xlu0 0
  %1425 = vperm.xlu0 %1424, %v1031
  %v1426 = vpop.permute.xlu0 %1425
  %1429 = vset.pattern.permute.xlu0 0
  %1430 = vperm.xlu0 %1429, %v1032
  %v1431 = vpop.permute.xlu0 %1430
  %1434 = vset.pattern.permute.xlu0 0
  %1435 = vperm.xlu0 %1434, %v1033
  %v1436 = vpop.permute.xlu0 %1435
  %1439 = vset.pattern.permute.xlu0 0
  %1440 = vperm.xlu0 %1439, %v1034
  %v1441 = vpop.permute.xlu0 %1440
  %1444 = vset.pattern.permute.xlu0 0
  %1445 = vperm.xlu0 %1444, %v1035
  %v1446 = vpop.permute.xlu0 %1445
  %1449 = vset.pattern.permute.xlu0 0
  %1450 = vperm.xlu0 %1449, %v1036
  %v1451 = vpop.permute.xlu0 %1450
  %1454 = vset.pattern.permute.xlu0 0
  %1455 = vperm.xlu0 %1454, %v1037
  %v1456 = vpop.permute.xlu0 %1455
  %1459 = vset.pattern.permute.xlu0 0
  %1460 = vperm.xlu0 %1459, %v1038
  %v1461 = vpop.permute.xlu0 %1460
  %1464 = vset.pattern.permute.xlu0 0
  %1465 = vperm.xlu0 %1464, %v1039
  %v1466 = vpop.permute.xlu0 %1465
  %1469 = vset.pattern.permute.xlu0 0
  %1470 = vperm.xlu0 %1469, %v1040
  %v1471 = vpop.permute.xlu0 %1470
  %v1473 = vmul.f32 %v1041, %v1116
  %v1474 = vmul.f32 %v1042, %v1121
  %v1475 = vmul.f32 %v1043, %v1126
  %v1476 = vmul.f32 %v1044, %v1131
  %v1477 = vmul.f32 %v1045, %v1136
  %v1478 = vmul.f32 %v1046, %v1141
  %v1479 = vmul.f32 %v1047, %v1146
  %v1480 = vmul.f32 %v1048, %v1151
  %v1481 = vmul.f32 %v1049, %v1156
  %v1482 = vmul.f32 %v1050, %v1161
  %v1483 = vmul.f32 %v1051, %v1166
  %v1484 = vmul.f32 %v1052, %v1171
  %v1485 = vmul.f32 %v1053, %v1176
  %v1486 = vmul.f32 %v1054, %v1181
  %v1487 = vmul.f32 %v1055, %v1186
  %v1488 = vmul.f32 %v1056, %v1191
  %v1489 = vmul.f32 %v1057, %v1196
  %v1490 = vmul.f32 %v1058, %v1201
  %v1491 = vmul.f32 %v1059, %v1206
  %v1492 = vmul.f32 %v1060, %v1211
  %v1493 = vmul.f32 %v1061, %v1216
  %v1494 = vmul.f32 %v1062, %v1221
  %v1495 = vmul.f32 %v1063, %v1226
  %v1496 = vmul.f32 %v1064, %v1231
  %v1497 = vmul.f32 %v1065, %v1236
  %v1498 = vmul.f32 %v1066, %v1241
  %v1499 = vmul.f32 %v1067, %v1246
  %v1500 = vmul.f32 %v1068, %v1251
  %v1501 = vmul.f32 %v1069, %v1256
  %v1502 = vmul.f32 %v1070, %v1261
  %v1503 = vmul.f32 %v1071, %v1266
  %v1504 = vmul.f32 %v1072, %v1271
  %v1505 = vmul.f32 %v1073, %v1276
  %v1506 = vmul.f32 %v1074, %v1281
  %v1507 = vmul.f32 %v1075, %v1286
  %v1508 = vmul.f32 %v1076, %v1291
  %v1509 = vmul.f32 %v1077, %v1296
  %v1510 = vmul.f32 %v1078, %v1301
  %v1511 = vmul.f32 %v1079, %v1306
  %v1512 = vmul.f32 %v1080, %v1311
  %v1513 = vmul.f32 %v1081, %v1316
  %v1514 = vmul.f32 %v1082, %v1321
  %v1515 = vmul.f32 %v1083, %v1326
  %v1516 = vmul.f32 %v1084, %v1331
  %v1517 = vmul.f32 %v1085, %v1336
  %v1518 = vmul.f32 %v1086, %v1341
  %v1519 = vmul.f32 %v1087, %v1346
  %v1520 = vmul.f32 %v1088, %v1351
  %v1521 = vmul.f32 %v1089, %v1356
  %v1522 = vmul.f32 %v1090, %v1361
  %v1523 = vmul.f32 %v1091, %v1366
  %v1524 = vmul.f32 %v1092, %v1371
  %v1525 = vmul.f32 %v1093, %v1376
  %v1526 = vmul.f32 %v1094, %v1381
  %v1527 = vmul.f32 %v1095, %v1386
  %v1528 = vmul.f32 %v1096, %v1391
  %v1529 = vmul.f32 %v1097, %v1396
  %v1530 = vmul.f32 %v1098, %v1401
  %v1531 = vmul.f32 %v1099, %v1406
  %v1532 = vmul.f32 %v1100, %v1411
  %v1533 = vmul.f32 %v1101, %v1416
  %v1534 = vmul.f32 %v1102, %v1421
  %v1535 = vmul.f32 %v1103, %v1426
  %v1536 = vmul.f32 %v1104, %v1431
  %v1537 = vmul.f32 %v1105, %v1436
  %v1538 = vmul.f32 %v1106, %v1441
  %v1539 = vmul.f32 %v1107, %v1446
  %v1540 = vmul.f32 %v1108, %v1451
  %v1541 = vmul.f32 %v1109, %v1456
  %v1542 = vmul.f32 %v1110, %v1461
  %v1543 = vmul.f32 %v1111, %v1466
  %v1544 = vmul.f32 %v1112, %v1471
  %v1545 = vld [vmem:[%s4] sm:$0xff]
  %v1546 = vld [vmem:[%s4 + $0x8] sm:$0xff]
  %v1547 = vld [vmem:[%s4 + $0x10] sm:$0xff]
  %v1548 = vld [vmem:[%s4 + $0x18] sm:$0xff]
  %v1549 = vld [vmem:[%s4 + $0x20] sm:$0xff]
  %v1550 = vld [vmem:[%s4 + $0x28] sm:$0xff]
  %v1551 = vld [vmem:[%s4 + $0x30] sm:$0xff]
  %v1552 = vld [vmem:[%s4 + $0x38] sm:$0xff]
  %v1553 = vld [vmem:[%s4 + $0x40] sm:$0xff]
  %v1554 = vld [vmem:[%s4 + $0x48] sm:$0xff]
  %v1555 = vld [vmem:[%s4 + $0x50] sm:$0xff]
  %v1556 = vld [vmem:[%s4 + $0x58] sm:$0xff]
  %v1557 = vld [vmem:[%s4 + $0x60] sm:$0xff]
  %v1558 = vld [vmem:[%s4 + $0x68] sm:$0xff]
  %v1559 = vld [vmem:[%s4 + $0x70] sm:$0xff]
  %v1560 = vld [vmem:[%s4 + $0x78] sm:$0xff]
  %v1561 = vld [vmem:[%s4 + $0x80] sm:$0xff]
  %v1562 = vld [vmem:[%s4 + $0x88] sm:$0xff]
  %v1563 = vld [vmem:[%s4 + $0x90] sm:$0xff]
  %v1564 = vld [vmem:[%s4 + $0x98] sm:$0xff]
  %v1565 = vld [vmem:[%s4 + $0xa0] sm:$0xff]
  %v1566 = vld [vmem:[%s4 + $0xa8] sm:$0xff]
  %v1567 = vld [vmem:[%s4 + $0xb0] sm:$0xff]
  %v1568 = vld [vmem:[%s4 + $0xb8] sm:$0xff]
  %v1569 = vld [vmem:[%s4 + $0xc0] sm:$0xff]
  %v1570 = vld [vmem:[%s4 + $0xc8] sm:$0xff]
  %v1571 = vld [vmem:[%s4 + $0xd0] sm:$0xff]
  %v1572 = vld [vmem:[%s4 + $0xd8] sm:$0xff]
  %v1573 = vld [vmem:[%s4 + $0xe0] sm:$0xff]
  %v1574 = vld [vmem:[%s4 + $0xe8] sm:$0xff]
  %v1575 = vld [vmem:[%s4 + $0xf0] sm:$0xff]
  %v1576 = vld [vmem:[%s4 + $0xf8] sm:$0xff]
  %v1577 = vld [vmem:[%s4 + $0x100] sm:$0xff]
  %v1578 = vld [vmem:[%s4 + $0x108] sm:$0xff]
  %v1579 = vld [vmem:[%s4 + $0x110] sm:$0xff]
  %v1580 = vld [vmem:[%s4 + $0x118] sm:$0xff]
  %v1581 = vld [vmem:[%s4 + $0x120] sm:$0xff]
  %v1582 = vld [vmem:[%s4 + $0x128] sm:$0xff]
  %v1583 = vld [vmem:[%s4 + $0x130] sm:$0xff]
  %v1584 = vld [vmem:[%s4 + $0x138] sm:$0xff]
  %v1585 = vld [vmem:[%s4 + $0x140] sm:$0xff]
  %v1586 = vld [vmem:[%s4 + $0x148] sm:$0xff]
  %v1587 = vld [vmem:[%s4 + $0x150] sm:$0xff]
  %v1588 = vld [vmem:[%s4 + $0x158] sm:$0xff]
  %v1589 = vld [vmem:[%s4 + $0x160] sm:$0xff]
  %v1590 = vld [vmem:[%s4 + $0x168] sm:$0xff]
  %v1591 = vld [vmem:[%s4 + $0x170] sm:$0xff]
  %v1592 = vld [vmem:[%s4 + $0x178] sm:$0xff]
  %v1593 = vld [vmem:[%s4 + $0x180] sm:$0xff]
  %v1594 = vld [vmem:[%s4 + $0x188] sm:$0xff]
  %v1595 = vld [vmem:[%s4 + $0x190] sm:$0xff]
  %v1596 = vld [vmem:[%s4 + $0x198] sm:$0xff]
  %v1597 = vld [vmem:[%s4 + $0x1a0] sm:$0xff]
  %v1598 = vld [vmem:[%s4 + $0x1a8] sm:$0xff]
  %v1599 = vld [vmem:[%s4 + $0x1b0] sm:$0xff]
  %v1600 = vld [vmem:[%s4 + $0x1b8] sm:$0xff]
  %v1601 = vld [vmem:[%s4 + $0x1c0] sm:$0xff]
  %v1602 = vld [vmem:[%s4 + $0x1c8] sm:$0xff]
  %v1603 = vld [vmem:[%s4 + $0x1d0] sm:$0xff]
  %v1604 = vld [vmem:[%s4 + $0x1d8] sm:$0xff]
  %vm1605 = vcmask 523264
  %v1607 = vsel %vm1605, %v1549, 0
  %v1610 = vsel %vm1605, %v1554, 0
  %v1613 = vsel %vm1605, %v1559, 0
  %v1616 = vsel %vm1605, %v1564, 0
  %v1619 = vsel %vm1605, %v1569, 0
  %v1622 = vsel %vm1605, %v1574, 0
  %v1625 = vsel %vm1605, %v1579, 0
  %v1628 = vsel %vm1605, %v1584, 0
  %v1631 = vsel %vm1605, %v1589, 0
  %v1634 = vsel %vm1605, %v1594, 0
  %v1637 = vsel %vm1605, %v1599, 0
  %v1640 = vsel %vm1605, %v1604, 0
  %1642 = vmatpush.msra.mxu0 %v1488
  %1643 = vmatpush.msra.mxu0 %v1487
  %1644 = vmatpush.msra.mxu0 %v1486
  %1645 = vmatpush.msra.mxu0 %v1485
  %1646 = vmatpush.msra.mxu0 %v1484
  %1647 = vmatpush.msra.mxu0 %v1483
  %1648 = vmatpush.msra.mxu0 %v1482
  %1649 = vmatpush.msra.mxu0 %v1481
  %1650 = vmatpush.msra.mxu0 %v1480
  %1651 = vmatpush.msra.mxu0 %v1479
  %1652 = vmatpush.msra.mxu0 %v1478
  %1653 = vmatpush.msra.mxu0 %v1477
  %1654 = vmatpush.msra.mxu0 %v1476
  %1655 = vmatpush.msra.mxu0 %v1475
  %1656 = vmatpush.msra.mxu0 %v1474
  %1657 = vmatpush.msra.mxu0 %v1473
  %1658 = vmatmul.f32.gmra.mxu0 %v1545
  %v1659 = vpop.f32.mrf.mxu0
  %v1660 = vadd.f32 0.0, %v1659
  %1661 = vmatmul.f32.gmra.mxu0 %v1550
  %v1662 = vpop.f32.mrf.mxu0
  %v1663 = vadd.f32 0.0, %v1662
  %1664 = vmatmul.f32.gmra.mxu0 %v1555
  %v1665 = vpop.f32.mrf.mxu0
  %v1666 = vadd.f32 0.0, %v1665
  %1667 = vmatmul.f32.gmra.mxu0 %v1560
  %v1668 = vpop.f32.mrf.mxu0
  %v1669 = vadd.f32 0.0, %v1668
  %1670 = vmatmul.f32.gmra.mxu0 %v1565
  %v1671 = vpop.f32.mrf.mxu0
  %v1672 = vadd.f32 0.0, %v1671
  %1673 = vmatmul.f32.gmra.mxu0 %v1570
  %v1674 = vpop.f32.mrf.mxu0
  %v1675 = vadd.f32 0.0, %v1674
  %1676 = vmatmul.f32.gmra.mxu0 %v1575
  %v1677 = vpop.f32.mrf.mxu0
  %v1678 = vadd.f32 0.0, %v1677
  %1679 = vmatmul.f32.gmra.mxu0 %v1580
  %v1680 = vpop.f32.mrf.mxu0
  %v1681 = vadd.f32 0.0, %v1680
  %1682 = vmatmul.f32.gmra.mxu0 %v1585
  %v1683 = vpop.f32.mrf.mxu0
  %v1684 = vadd.f32 0.0, %v1683
  %1685 = vmatmul.f32.gmra.mxu0 %v1590
  %v1686 = vpop.f32.mrf.mxu0
  %v1687 = vadd.f32 0.0, %v1686
  %1688 = vmatmul.f32.gmra.mxu0 %v1595
  %v1689 = vpop.f32.mrf.mxu0
  %v1690 = vadd.f32 0.0, %v1689
  %1691 = vmatmul.f32.gmra.mxu0 %v1600
  %v1692 = vpop.f32.mrf.mxu0
  %v1693 = vadd.f32 0.0, %v1692
  %1694 = vdwg.mxu0
  %1695 = vmatpush.msra.mxu0 %v1504
  %1696 = vmatpush.msra.mxu0 %v1503
  %1697 = vmatpush.msra.mxu0 %v1502
  %1698 = vmatpush.msra.mxu0 %v1501
  %1699 = vmatpush.msra.mxu0 %v1500
  %1700 = vmatpush.msra.mxu0 %v1499
  %1701 = vmatpush.msra.mxu0 %v1498
  %1702 = vmatpush.msra.mxu0 %v1497
  %1703 = vmatpush.msra.mxu0 %v1496
  %1704 = vmatpush.msra.mxu0 %v1495
  %1705 = vmatpush.msra.mxu0 %v1494
  %1706 = vmatpush.msra.mxu0 %v1493
  %1707 = vmatpush.msra.mxu0 %v1492
  %1708 = vmatpush.msra.mxu0 %v1491
  %1709 = vmatpush.msra.mxu0 %v1490
  %1710 = vmatpush.msra.mxu0 %v1489
  %1711 = vmatmul.f32.gmra.mxu0 %v1546
  %v1712 = vpop.f32.mrf.mxu0
  %v1713 = vadd.f32 %v1660, %v1712
  %1714 = vmatmul.f32.gmra.mxu0 %v1551
  %v1715 = vpop.f32.mrf.mxu0
  %v1716 = vadd.f32 %v1663, %v1715
  %1717 = vmatmul.f32.gmra.mxu0 %v1556
  %v1718 = vpop.f32.mrf.mxu0
  %v1719 = vadd.f32 %v1666, %v1718
  %1720 = vmatmul.f32.gmra.mxu0 %v1561
  %v1721 = vpop.f32.mrf.mxu0
  %v1722 = vadd.f32 %v1669, %v1721
  %1723 = vmatmul.f32.gmra.mxu0 %v1566
  %v1724 = vpop.f32.mrf.mxu0
  %v1725 = vadd.f32 %v1672, %v1724
  %1726 = vmatmul.f32.gmra.mxu0 %v1571
  %v1727 = vpop.f32.mrf.mxu0
  %v1728 = vadd.f32 %v1675, %v1727
  %1729 = vmatmul.f32.gmra.mxu0 %v1576
  %v1730 = vpop.f32.mrf.mxu0
  %v1731 = vadd.f32 %v1678, %v1730
  %1732 = vmatmul.f32.gmra.mxu0 %v1581
  %v1733 = vpop.f32.mrf.mxu0
  %v1734 = vadd.f32 %v1681, %v1733
  %1735 = vmatmul.f32.gmra.mxu0 %v1586
  %v1736 = vpop.f32.mrf.mxu0
  %v1737 = vadd.f32 %v1684, %v1736
  %1738 = vmatmul.f32.gmra.mxu0 %v1591
  %v1739 = vpop.f32.mrf.mxu0
  %v1740 = vadd.f32 %v1687, %v1739
  %1741 = vmatmul.f32.gmra.mxu0 %v1596
  %v1742 = vpop.f32.mrf.mxu0
  %v1743 = vadd.f32 %v1690, %v1742
  %1744 = vmatmul.f32.gmra.mxu0 %v1601
  %v1745 = vpop.f32.mrf.mxu0
  %v1746 = vadd.f32 %v1693, %v1745
  %1747 = vdwg.mxu0
  %1748 = vmatpush.msra.mxu0 %v1520
  %1749 = vmatpush.msra.mxu0 %v1519
  %1750 = vmatpush.msra.mxu0 %v1518
  %1751 = vmatpush.msra.mxu0 %v1517
  %1752 = vmatpush.msra.mxu0 %v1516
  %1753 = vmatpush.msra.mxu0 %v1515
  %1754 = vmatpush.msra.mxu0 %v1514
  %1755 = vmatpush.msra.mxu0 %v1513
  %1756 = vmatpush.msra.mxu0 %v1512
  %1757 = vmatpush.msra.mxu0 %v1511
  %1758 = vmatpush.msra.mxu0 %v1510
  %1759 = vmatpush.msra.mxu0 %v1509
  %1760 = vmatpush.msra.mxu0 %v1508
  %1761 = vmatpush.msra.mxu0 %v1507
  %1762 = vmatpush.msra.mxu0 %v1506
  %1763 = vmatpush.msra.mxu0 %v1505
  %1764 = vmatmul.f32.gmra.mxu0 %v1547
  %v1765 = vpop.f32.mrf.mxu0
  %v1766 = vadd.f32 %v1713, %v1765
  %1767 = vmatmul.f32.gmra.mxu0 %v1552
  %v1768 = vpop.f32.mrf.mxu0
  %v1769 = vadd.f32 %v1716, %v1768
  %1770 = vmatmul.f32.gmra.mxu0 %v1557
  %v1771 = vpop.f32.mrf.mxu0
  %v1772 = vadd.f32 %v1719, %v1771
  %1773 = vmatmul.f32.gmra.mxu0 %v1562
  %v1774 = vpop.f32.mrf.mxu0
  %v1775 = vadd.f32 %v1722, %v1774
  %1776 = vmatmul.f32.gmra.mxu0 %v1567
  %v1777 = vpop.f32.mrf.mxu0
  %v1778 = vadd.f32 %v1725, %v1777
  %1779 = vmatmul.f32.gmra.mxu0 %v1572
  %v1780 = vpop.f32.mrf.mxu0
  %v1781 = vadd.f32 %v1728, %v1780
  %1782 = vmatmul.f32.gmra.mxu0 %v1577
  %v1783 = vpop.f32.mrf.mxu0
  %v1784 = vadd.f32 %v1731, %v1783
  %1785 = vmatmul.f32.gmra.mxu0 %v1582
  %v1786 = vpop.f32.mrf.mxu0
  %v1787 = vadd.f32 %v1734, %v1786
  %1788 = vmatmul.f32.gmra.mxu0 %v1587
  %v1789 = vpop.f32.mrf.mxu0
  %v1790 = vadd.f32 %v1737, %v1789
  %1791 = vmatmul.f32.gmra.mxu0 %v1592
  %v1792 = vpop.f32.mrf.mxu0
  %v1793 = vadd.f32 %v1740, %v1792
  %1794 = vmatmul.f32.gmra.mxu0 %v1597
  %v1795 = vpop.f32.mrf.mxu0
  %v1796 = vadd.f32 %v1743, %v1795
  %1797 = vmatmul.f32.gmra.mxu0 %v1602
  %v1798 = vpop.f32.mrf.mxu0
  %v1799 = vadd.f32 %v1746, %v1798
  %1800 = vdwg.mxu0
  %1801 = vmatpush.msra.mxu0 %v1536
  %1802 = vmatpush.msra.mxu0 %v1535
  %1803 = vmatpush.msra.mxu0 %v1534
  %1804 = vmatpush.msra.mxu0 %v1533
  %1805 = vmatpush.msra.mxu0 %v1532
  %1806 = vmatpush.msra.mxu0 %v1531
  %1807 = vmatpush.msra.mxu0 %v1530
  %1808 = vmatpush.msra.mxu0 %v1529
  %1809 = vmatpush.msra.mxu0 %v1528
  %1810 = vmatpush.msra.mxu0 %v1527
  %1811 = vmatpush.msra.mxu0 %v1526
  %1812 = vmatpush.msra.mxu0 %v1525
  %1813 = vmatpush.msra.mxu0 %v1524
  %1814 = vmatpush.msra.mxu0 %v1523
  %1815 = vmatpush.msra.mxu0 %v1522
  %1816 = vmatpush.msra.mxu0 %v1521
  %1817 = vmatmul.f32.gmra.mxu0 %v1548
  %v1818 = vpop.f32.mrf.mxu0
  %v1819 = vadd.f32 %v1766, %v1818
  %1820 = vmatmul.f32.gmra.mxu0 %v1553
  %v1821 = vpop.f32.mrf.mxu0
  %v1822 = vadd.f32 %v1769, %v1821
  %1823 = vmatmul.f32.gmra.mxu0 %v1558
  %v1824 = vpop.f32.mrf.mxu0
  %v1825 = vadd.f32 %v1772, %v1824
  %1826 = vmatmul.f32.gmra.mxu0 %v1563
  %v1827 = vpop.f32.mrf.mxu0
  %v1828 = vadd.f32 %v1775, %v1827
  %1829 = vmatmul.f32.gmra.mxu0 %v1568
  %v1830 = vpop.f32.mrf.mxu0
  %v1831 = vadd.f32 %v1778, %v1830
  %1832 = vmatmul.f32.gmra.mxu0 %v1573
  %v1833 = vpop.f32.mrf.mxu0
  %v1834 = vadd.f32 %v1781, %v1833
  %1835 = vmatmul.f32.gmra.mxu0 %v1578
  %v1836 = vpop.f32.mrf.mxu0
  %v1837 = vadd.f32 %v1784, %v1836
  %1838 = vmatmul.f32.gmra.mxu0 %v1583
  %v1839 = vpop.f32.mrf.mxu0
  %v1840 = vadd.f32 %v1787, %v1839
  %1841 = vmatmul.f32.gmra.mxu0 %v1588
  %v1842 = vpop.f32.mrf.mxu0
  %v1843 = vadd.f32 %v1790, %v1842
  %1844 = vmatmul.f32.gmra.mxu0 %v1593
  %v1845 = vpop.f32.mrf.mxu0
  %v1846 = vadd.f32 %v1793, %v1845
  %1847 = vmatmul.f32.gmra.mxu0 %v1598
  %v1848 = vpop.f32.mrf.mxu0
  %v1849 = vadd.f32 %v1796, %v1848
  %1850 = vmatmul.f32.gmra.mxu0 %v1603
  %v1851 = vpop.f32.mrf.mxu0
  %v1852 = vadd.f32 %v1799, %v1851
  %1853 = vdwg.mxu0
  %1854 = vmatpush.msra.mxu0 0.0
  %1855 = vmatpush.msra.mxu0 0.0
  %1856 = vmatpush.msra.mxu0 0.0
  %1857 = vmatpush.msra.mxu0 0.0
  %1858 = vmatpush.msra.mxu0 0.0
  %1859 = vmatpush.msra.mxu0 0.0
  %1860 = vmatpush.msra.mxu0 0.0
  %1861 = vmatpush.msra.mxu0 0.0
  %1862 = vmatpush.msra.mxu0 %v1544
  %1863 = vmatpush.msra.mxu0 %v1543
  %1864 = vmatpush.msra.mxu0 %v1542
  %1865 = vmatpush.msra.mxu0 %v1541
  %1866 = vmatpush.msra.mxu0 %v1540
  %1867 = vmatpush.msra.mxu0 %v1539
  %1868 = vmatpush.msra.mxu0 %v1538
  %1869 = vmatpush.msra.mxu0 %v1537
  %1870 = vmatmul.f32.gmra.mxu0 %v1607
  %v1871 = vpop.f32.mrf.mxu0
  %v1872 = vadd.f32 %v1819, %v1871
  %1873 = vmatmul.f32.gmra.mxu0 %v1610
  %v1874 = vpop.f32.mrf.mxu0
  %v1875 = vadd.f32 %v1822, %v1874
  %1876 = vmatmul.f32.gmra.mxu0 %v1613
  %v1877 = vpop.f32.mrf.mxu0
  %v1878 = vadd.f32 %v1825, %v1877
  %1879 = vmatmul.f32.gmra.mxu0 %v1616
  %v1880 = vpop.f32.mrf.mxu0
  %v1881 = vadd.f32 %v1828, %v1880
  %1882 = vmatmul.f32.gmra.mxu0 %v1619
  %v1883 = vpop.f32.mrf.mxu0
  %v1884 = vadd.f32 %v1831, %v1883
  %1885 = vmatmul.f32.gmra.mxu0 %v1622
  %v1886 = vpop.f32.mrf.mxu0
  %v1887 = vadd.f32 %v1834, %v1886
  %1888 = vmatmul.f32.gmra.mxu0 %v1625
  %v1889 = vpop.f32.mrf.mxu0
  %v1890 = vadd.f32 %v1837, %v1889
  %1891 = vmatmul.f32.gmra.mxu0 %v1628
  %v1892 = vpop.f32.mrf.mxu0
  %v1893 = vadd.f32 %v1840, %v1892
  %1894 = vmatmul.f32.gmra.mxu0 %v1631
  %v1895 = vpop.f32.mrf.mxu0
  %v1896 = vadd.f32 %v1843, %v1895
  %1897 = vmatmul.f32.gmra.mxu0 %v1634
  %v1898 = vpop.f32.mrf.mxu0
  %v1899 = vadd.f32 %v1846, %v1898
  %1900 = vmatmul.f32.gmra.mxu0 %v1637
  %v1901 = vpop.f32.mrf.mxu0
  %v1902 = vadd.f32 %v1849, %v1901
  %1903 = vmatmul.f32.gmra.mxu0 %v1640
  %v1904 = vpop.f32.mrf.mxu0
  %v1905 = vadd.f32 %v1852, %v1904
  %1906 = vdwg.mxu0
  %vm1907 = vcmask 400384
  %v1908 = vsel %vm1907, %v1872, 0.0
  %1909 = vadd.xlane.f32.xlu0 %v1908
  %v1910 = vpop.xlane.xlu0 %1909
  %v1911 = vsel %vm1907, %v1875, 0.0
  %1912 = vadd.xlane.f32.xlu0 %v1911
  %v1913 = vpop.xlane.xlu0 %1912
  %v1914 = vsel %vm1907, %v1878, 0.0
  %1915 = vadd.xlane.f32.xlu0 %v1914
  %v1916 = vpop.xlane.xlu0 %1915
  %v1917 = vsel %vm1907, %v1881, 0.0
  %1918 = vadd.xlane.f32.xlu0 %v1917
  %v1919 = vpop.xlane.xlu0 %1918
  %v1920 = vsel %vm1907, %v1884, 0.0
  %1921 = vadd.xlane.f32.xlu0 %v1920
  %v1922 = vpop.xlane.xlu0 %1921
  %v1923 = vsel %vm1907, %v1887, 0.0
  %1924 = vadd.xlane.f32.xlu0 %v1923
  %v1925 = vpop.xlane.xlu0 %1924
  %v1926 = vsel %vm1907, %v1890, 0.0
  %1927 = vadd.xlane.f32.xlu0 %v1926
  %v1928 = vpop.xlane.xlu0 %1927
  %v1929 = vsel %vm1907, %v1893, 0.0
  %1930 = vadd.xlane.f32.xlu0 %v1929
  %v1931 = vpop.xlane.xlu0 %1930
  %v1932 = vsel %vm1907, %v1896, 0.0
  %1933 = vadd.xlane.f32.xlu0 %v1932
  %v1934 = vpop.xlane.xlu0 %1933
  %v1935 = vsel %vm1907, %v1899, 0.0
  %1936 = vadd.xlane.f32.xlu0 %v1935
  %v1937 = vpop.xlane.xlu0 %1936
  %v1938 = vsel %vm1907, %v1902, 0.0
  %1939 = vadd.xlane.f32.xlu0 %v1938
  %v1940 = vpop.xlane.xlu0 %1939
  %v1941 = vsel %vm1907, %v1905, 0.0
  %1942 = vadd.xlane.f32.xlu0 %v1941
  %v1943 = vpop.xlane.xlu0 %1942
  %v1944 = vrcp.pop 49.0
  %v1945 = vmul.f32 49.0, %v1944
  %v1946 = vsub.f32 1.0, %v1945
  %v1947 = vmul.f32 %v1944, %v1946
  %v1948 = vadd.f32 %v1944, %v1947
  %vm1949 = vweird.f32 %v1944
  %v1950 = vsel %vm1949, %v1944, %v1948
  %v1951 = vmul.f32 %v1910, %v1950
  %v1952 = vmul.f32 %v1913, %v1950
  %v1953 = vmul.f32 %v1916, %v1950
  %v1954 = vmul.f32 %v1919, %v1950
  %v1955 = vmul.f32 %v1922, %v1950
  %v1956 = vmul.f32 %v1925, %v1950
  %v1957 = vmul.f32 %v1928, %v1950
  %v1958 = vmul.f32 %v1931, %v1950
  %v1959 = vmul.f32 %v1934, %v1950
  %v1960 = vmul.f32 %v1937, %v1950
  %v1961 = vmul.f32 %v1940, %v1950
  %v1962 = vmul.f32 %v1943, %v1950
  %v1963 = vsub.f32 %v1872, %v1951
  %v1964 = vsub.f32 %v1875, %v1952
  %v1965 = vsub.f32 %v1878, %v1953
  %v1966 = vsub.f32 %v1881, %v1954
  %v1967 = vsub.f32 %v1884, %v1955
  %v1968 = vsub.f32 %v1887, %v1956
  %v1969 = vsub.f32 %v1890, %v1957
  %v1970 = vsub.f32 %v1893, %v1958
  %v1971 = vsub.f32 %v1896, %v1959
  %v1972 = vsub.f32 %v1899, %v1960
  %v1973 = vsub.f32 %v1902, %v1961
  %v1974 = vsub.f32 %v1905, %v1962
  %v1975 = vmul.f32 %v1963, %v1963
  %v1976 = vmul.f32 %v1964, %v1964
  %v1977 = vmul.f32 %v1965, %v1965
  %v1978 = vmul.f32 %v1966, %v1966
  %v1979 = vmul.f32 %v1967, %v1967
  %v1980 = vmul.f32 %v1968, %v1968
  %v1981 = vmul.f32 %v1969, %v1969
  %v1982 = vmul.f32 %v1970, %v1970
  %v1983 = vmul.f32 %v1971, %v1971
  %v1984 = vmul.f32 %v1972, %v1972
  %v1985 = vmul.f32 %v1973, %v1973
  %v1986 = vmul.f32 %v1974, %v1974
  %v1987 = vsel %vm1907, %v1975, 0.0
  %1988 = vadd.xlane.f32.xlu0 %v1987
  %v1989 = vpop.xlane.xlu0 %1988
  %v1990 = vsel %vm1907, %v1976, 0.0
  %1991 = vadd.xlane.f32.xlu0 %v1990
  %v1992 = vpop.xlane.xlu0 %1991
  %v1993 = vsel %vm1907, %v1977, 0.0
  %1994 = vadd.xlane.f32.xlu0 %v1993
  %v1995 = vpop.xlane.xlu0 %1994
  %v1996 = vsel %vm1907, %v1978, 0.0
  %1997 = vadd.xlane.f32.xlu0 %v1996
  %v1998 = vpop.xlane.xlu0 %1997
  %v1999 = vsel %vm1907, %v1979, 0.0
  %2000 = vadd.xlane.f32.xlu0 %v1999
  %v2001 = vpop.xlane.xlu0 %2000
  %v2002 = vsel %vm1907, %v1980, 0.0
  %2003 = vadd.xlane.f32.xlu0 %v2002
  %v2004 = vpop.xlane.xlu0 %2003
  %v2005 = vsel %vm1907, %v1981, 0.0
  %2006 = vadd.xlane.f32.xlu0 %v2005
  %v2007 = vpop.xlane.xlu0 %2006
  %v2008 = vsel %vm1907, %v1982, 0.0
  %2009 = vadd.xlane.f32.xlu0 %v2008
  %v2010 = vpop.xlane.xlu0 %2009
  %v2011 = vsel %vm1907, %v1983, 0.0
  %2012 = vadd.xlane.f32.xlu0 %v2011
  %v2013 = vpop.xlane.xlu0 %2012
  %v2014 = vsel %vm1907, %v1984, 0.0
  %2015 = vadd.xlane.f32.xlu0 %v2014
  %v2016 = vpop.xlane.xlu0 %2015
  %v2017 = vsel %vm1907, %v1985, 0.0
  %2018 = vadd.xlane.f32.xlu0 %v2017
  %v2019 = vpop.xlane.xlu0 %2018
  %v2020 = vsel %vm1907, %v1986, 0.0
  %2021 = vadd.xlane.f32.xlu0 %v2020
  %v2022 = vpop.xlane.xlu0 %2021
  %v2023 = vmul.f32 %v1989, %v1950
  %v2024 = vmul.f32 %v1992, %v1950
  %v2025 = vmul.f32 %v1995, %v1950
  %v2026 = vmul.f32 %v1998, %v1950
  %v2027 = vmul.f32 %v2001, %v1950
  %v2028 = vmul.f32 %v2004, %v1950
  %v2029 = vmul.f32 %v2007, %v1950
  %v2030 = vmul.f32 %v2010, %v1950
  %v2031 = vmul.f32 %v2013, %v1950
  %v2032 = vmul.f32 %v2016, %v1950
  %v2033 = vmul.f32 %v2019, %v1950
  %v2034 = vmul.f32 %v2022, %v1950
  %v2035 = vld [vmem:[%s5] sm:$0xff]
  %v2036 = vld [vmem:[%s5 + $0x8] sm:$0xff]
  %v2037 = vld [vmem:[%s5 + $0x10] sm:$0xff]
  %v2038 = vld [vmem:[%s5 + $0x18] sm:$0xff]
  %v2039 = vld [vmem:[%s5 + $0x20] sm:$0xff]
  %v2040 = vld [vmem:[%s5 + $0x28] sm:$0xff]
  %v2041 = vld [vmem:[%s5 + $0x30] sm:$0xff]
  %v2042 = vld [vmem:[%s5 + $0x38] sm:$0xff]
  %v2043 = vld [vmem:[%s5 + $0x40] sm:$0xff]
  %v2044 = vld [vmem:[%s5 + $0x48] sm:$0xff]
  %v2045 = vld [vmem:[%s5 + $0x50] sm:$0xff]
  %v2046 = vld [vmem:[%s5 + $0x58] sm:$0xff]
  %v2047 = vadd.f32 %v2023, 0.001
  %v2048 = vadd.f32 %v2024, 0.001
  %v2049 = vadd.f32 %v2025, 0.001
  %v2050 = vadd.f32 %v2026, 0.001
  %v2051 = vadd.f32 %v2027, 0.001
  %v2052 = vadd.f32 %v2028, 0.001
  %v2053 = vadd.f32 %v2029, 0.001
  %v2054 = vadd.f32 %v2030, 0.001
  %v2055 = vadd.f32 %v2031, 0.001
  %v2056 = vadd.f32 %v2032, 0.001
  %v2057 = vadd.f32 %v2033, 0.001
  %v2058 = vadd.f32 %v2034, 0.001
  %v2059 = vrsqrt.pop %v2047
  %v2060 = vmul.f32 %v2059, %v2047
  %v2061 = vmul.f32 %v2060, %v2059
  %v2062 = vmul.f32 0.5, %v2061
  %v2063 = vsub.f32 1.5, %v2062
  %v2064 = vmul.f32 %v2059, %v2063
  %vm2065 = vweird.f32 %v2047
  %vm2066 = vweird.f32 %v2059
  %vm2067 = vmor %vm2065, %vm2066
  %v2068 = vsel %vm2067, %v2059, %v2064
  %v2069 = vrsqrt.pop %v2048
  %v2070 = vmul.f32 %v2069, %v2048
  %v2071 = vmul.f32 %v2070, %v2069
  %v2072 = vmul.f32 0.5, %v2071
  %v2073 = vsub.f32 1.5, %v2072
  %v2074 = vmul.f32 %v2069, %v2073
  %vm2075 = vweird.f32 %v2048
  %vm2076 = vweird.f32 %v2069
  %vm2077 = vmor %vm2075, %vm2076
  %v2078 = vsel %vm2077, %v2069, %v2074
  %v2079 = vrsqrt.pop %v2049
  %v2080 = vmul.f32 %v2079, %v2049
  %v2081 = vmul.f32 %v2080, %v2079
  %v2082 = vmul.f32 0.5, %v2081
  %v2083 = vsub.f32 1.5, %v2082
  %v2084 = vmul.f32 %v2079, %v2083
  %vm2085 = vweird.f32 %v2049
  %vm2086 = vweird.f32 %v2079
  %vm2087 = vmor %vm2085, %vm2086
  %v2088 = vsel %vm2087, %v2079, %v2084
  %v2089 = vrsqrt.pop %v2050
  %v2090 = vmul.f32 %v2089, %v2050
  %v2091 = vmul.f32 %v2090, %v2089
  %v2092 = vmul.f32 0.5, %v2091
  %v2093 = vsub.f32 1.5, %v2092
  %v2094 = vmul.f32 %v2089, %v2093
  %vm2095 = vweird.f32 %v2050
  %vm2096 = vweird.f32 %v2089
  %vm2097 = vmor %vm2095, %vm2096
  %v2098 = vsel %vm2097, %v2089, %v2094
  %v2099 = vrsqrt.pop %v2051
  %v2100 = vmul.f32 %v2099, %v2051
  %v2101 = vmul.f32 %v2100, %v2099
  %v2102 = vmul.f32 0.5, %v2101
  %v2103 = vsub.f32 1.5, %v2102
  %v2104 = vmul.f32 %v2099, %v2103
  %vm2105 = vweird.f32 %v2051
  %vm2106 = vweird.f32 %v2099
  %vm2107 = vmor %vm2105, %vm2106
  %v2108 = vsel %vm2107, %v2099, %v2104
  %v2109 = vrsqrt.pop %v2052
  %v2110 = vmul.f32 %v2109, %v2052
  %v2111 = vmul.f32 %v2110, %v2109
  %v2112 = vmul.f32 0.5, %v2111
  %v2113 = vsub.f32 1.5, %v2112
  %v2114 = vmul.f32 %v2109, %v2113
  %vm2115 = vweird.f32 %v2052
  %vm2116 = vweird.f32 %v2109
  %vm2117 = vmor %vm2115, %vm2116
  %v2118 = vsel %vm2117, %v2109, %v2114
  %v2119 = vrsqrt.pop %v2053
  %v2120 = vmul.f32 %v2119, %v2053
  %v2121 = vmul.f32 %v2120, %v2119
  %v2122 = vmul.f32 0.5, %v2121
  %v2123 = vsub.f32 1.5, %v2122
  %v2124 = vmul.f32 %v2119, %v2123
  %vm2125 = vweird.f32 %v2053
  %vm2126 = vweird.f32 %v2119
  %vm2127 = vmor %vm2125, %vm2126
  %v2128 = vsel %vm2127, %v2119, %v2124
  %v2129 = vrsqrt.pop %v2054
  %v2130 = vmul.f32 %v2129, %v2054
  %v2131 = vmul.f32 %v2130, %v2129
  %v2132 = vmul.f32 0.5, %v2131
  %v2133 = vsub.f32 1.5, %v2132
  %v2134 = vmul.f32 %v2129, %v2133
  %vm2135 = vweird.f32 %v2054
  %vm2136 = vweird.f32 %v2129
  %vm2137 = vmor %vm2135, %vm2136
  %v2138 = vsel %vm2137, %v2129, %v2134
  %v2139 = vrsqrt.pop %v2055
  %v2140 = vmul.f32 %v2139, %v2055
  %v2141 = vmul.f32 %v2140, %v2139
  %v2142 = vmul.f32 0.5, %v2141
  %v2143 = vsub.f32 1.5, %v2142
  %v2144 = vmul.f32 %v2139, %v2143
  %vm2145 = vweird.f32 %v2055
  %vm2146 = vweird.f32 %v2139
  %vm2147 = vmor %vm2145, %vm2146
  %v2148 = vsel %vm2147, %v2139, %v2144
  %v2149 = vrsqrt.pop %v2056
  %v2150 = vmul.f32 %v2149, %v2056
  %v2151 = vmul.f32 %v2150, %v2149
  %v2152 = vmul.f32 0.5, %v2151
  %v2153 = vsub.f32 1.5, %v2152
  %v2154 = vmul.f32 %v2149, %v2153
  %vm2155 = vweird.f32 %v2056
  %vm2156 = vweird.f32 %v2149
  %vm2157 = vmor %vm2155, %vm2156
  %v2158 = vsel %vm2157, %v2149, %v2154
  %v2159 = vrsqrt.pop %v2057
  %v2160 = vmul.f32 %v2159, %v2057
  %v2161 = vmul.f32 %v2160, %v2159
  %v2162 = vmul.f32 0.5, %v2161
  %v2163 = vsub.f32 1.5, %v2162
  %v2164 = vmul.f32 %v2159, %v2163
  %vm2165 = vweird.f32 %v2057
  %vm2166 = vweird.f32 %v2159
  %vm2167 = vmor %vm2165, %vm2166
  %v2168 = vsel %vm2167, %v2159, %v2164
  %v2169 = vrsqrt.pop %v2058
  %v2170 = vmul.f32 %v2169, %v2058
  %v2171 = vmul.f32 %v2170, %v2169
  %v2172 = vmul.f32 0.5, %v2171
  %v2173 = vsub.f32 1.5, %v2172
  %v2174 = vmul.f32 %v2169, %v2173
  %vm2175 = vweird.f32 %v2058
  %vm2176 = vweird.f32 %v2169
  %vm2177 = vmor %vm2175, %vm2176
  %v2178 = vsel %vm2177, %v2169, %v2174
  %v2179 = vmul.f32 %v2035, %v2068
  %v2180 = vmul.f32 %v2036, %v2078
  %v2181 = vmul.f32 %v2037, %v2088
  %v2182 = vmul.f32 %v2038, %v2098
  %v2183 = vmul.f32 %v2039, %v2108
  %v2184 = vmul.f32 %v2040, %v2118
  %v2185 = vmul.f32 %v2041, %v2128
  %v2186 = vmul.f32 %v2042, %v2138
  %v2187 = vmul.f32 %v2043, %v2148
  %v2188 = vmul.f32 %v2044, %v2158
  %v2189 = vmul.f32 %v2045, %v2168
  %v2190 = vmul.f32 %v2046, %v2178
  %v2191 = vld [vmem:[%s6] sm:$0xff]
  %v2192 = vld [vmem:[%s6 + $0x8] sm:$0xff]
  %v2193 = vld [vmem:[%s6 + $0x10] sm:$0xff]
  %v2194 = vld [vmem:[%s6 + $0x18] sm:$0xff]
  %v2195 = vld [vmem:[%s6 + $0x20] sm:$0xff]
  %v2196 = vld [vmem:[%s6 + $0x28] sm:$0xff]
  %v2197 = vld [vmem:[%s6 + $0x30] sm:$0xff]
  %v2198 = vld [vmem:[%s6 + $0x38] sm:$0xff]
  %v2199 = vld [vmem:[%s6 + $0x40] sm:$0xff]
  %v2200 = vld [vmem:[%s6 + $0x48] sm:$0xff]
  %v2201 = vld [vmem:[%s6 + $0x50] sm:$0xff]
  %v2202 = vld [vmem:[%s6 + $0x58] sm:$0xff]
  %v2203 = vmul.f32 %v1951, %v2179
  %v2204 = vmul.f32 %v1952, %v2180
  %v2205 = vmul.f32 %v1953, %v2181
  %v2206 = vmul.f32 %v1954, %v2182
  %v2207 = vmul.f32 %v1955, %v2183
  %v2208 = vmul.f32 %v1956, %v2184
  %v2209 = vmul.f32 %v1957, %v2185
  %v2210 = vmul.f32 %v1958, %v2186
  %v2211 = vmul.f32 %v1959, %v2187
  %v2212 = vmul.f32 %v1960, %v2188
  %v2213 = vmul.f32 %v1961, %v2189
  %v2214 = vmul.f32 %v1962, %v2190
  %v2215 = vsub.f32 %v2191, %v2203
  %v2216 = vsub.f32 %v2192, %v2204
  %v2217 = vsub.f32 %v2193, %v2205
  %v2218 = vsub.f32 %v2194, %v2206
  %v2219 = vsub.f32 %v2195, %v2207
  %v2220 = vsub.f32 %v2196, %v2208
  %v2221 = vsub.f32 %v2197, %v2209
  %v2222 = vsub.f32 %v2198, %v2210
  %v2223 = vsub.f32 %v2199, %v2211
  %v2224 = vsub.f32 %v2200, %v2212
  %v2225 = vsub.f32 %v2201, %v2213
  %v2226 = vsub.f32 %v2202, %v2214
  %2228 = vset.pattern.permute.xlu0 0
  %2229 = vperm.xlu0 %2228, %v2179
  %v2230 = vpop.permute.xlu0 %2229
  %2233 = vset.pattern.permute.xlu0 0
  %2234 = vperm.xlu0 %2233, %v2180
  %v2235 = vpop.permute.xlu0 %2234
  %2238 = vset.pattern.permute.xlu0 0
  %2239 = vperm.xlu0 %2238, %v2181
  %v2240 = vpop.permute.xlu0 %2239
  %2243 = vset.pattern.permute.xlu0 0
  %2244 = vperm.xlu0 %2243, %v2182
  %v2245 = vpop.permute.xlu0 %2244
  %2248 = vset.pattern.permute.xlu0 0
  %2249 = vperm.xlu0 %2248, %v2183
  %v2250 = vpop.permute.xlu0 %2249
  %2253 = vset.pattern.permute.xlu0 0
  %2254 = vperm.xlu0 %2253, %v2184
  %v2255 = vpop.permute.xlu0 %2254
  %2258 = vset.pattern.permute.xlu0 0
  %2259 = vperm.xlu0 %2258, %v2185
  %v2260 = vpop.permute.xlu0 %2259
  %2263 = vset.pattern.permute.xlu0 0
  %2264 = vperm.xlu0 %2263, %v2186
  %v2265 = vpop.permute.xlu0 %2264
  %2268 = vset.pattern.permute.xlu0 0
  %2269 = vperm.xlu0 %2268, %v2187
  %v2270 = vpop.permute.xlu0 %2269
  %2273 = vset.pattern.permute.xlu0 0
  %2274 = vperm.xlu0 %2273, %v2188
  %v2275 = vpop.permute.xlu0 %2274
  %2278 = vset.pattern.permute.xlu0 0
  %2279 = vperm.xlu0 %2278, %v2189
  %v2280 = vpop.permute.xlu0 %2279
  %2283 = vset.pattern.permute.xlu0 0
  %2284 = vperm.xlu0 %2283, %v2190
  %v2285 = vpop.permute.xlu0 %2284
  %v2287 = vmul.f32 %v1872, %v2230
  %v2288 = vmul.f32 %v1875, %v2235
  %v2289 = vmul.f32 %v1878, %v2240
  %v2290 = vmul.f32 %v1881, %v2245
  %v2291 = vmul.f32 %v1884, %v2250
  %v2292 = vmul.f32 %v1887, %v2255
  %v2293 = vmul.f32 %v1890, %v2260
  %v2294 = vmul.f32 %v1893, %v2265
  %v2295 = vmul.f32 %v1896, %v2270
  %v2296 = vmul.f32 %v1899, %v2275
  %v2297 = vmul.f32 %v1902, %v2280
  %v2298 = vmul.f32 %v1905, %v2285
  %2300 = vset.pattern.permute.xlu0 0
  %2301 = vperm.xlu0 %2300, %v2215
  %v2302 = vpop.permute.xlu0 %2301
  %2305 = vset.pattern.permute.xlu0 0
  %2306 = vperm.xlu0 %2305, %v2216
  %v2307 = vpop.permute.xlu0 %2306
  %2310 = vset.pattern.permute.xlu0 0
  %2311 = vperm.xlu0 %2310, %v2217
  %v2312 = vpop.permute.xlu0 %2311
  %2315 = vset.pattern.permute.xlu0 0
  %2316 = vperm.xlu0 %2315, %v2218
  %v2317 = vpop.permute.xlu0 %2316
  %2320 = vset.pattern.permute.xlu0 0
  %2321 = vperm.xlu0 %2320, %v2219
  %v2322 = vpop.permute.xlu0 %2321
  %2325 = vset.pattern.permute.xlu0 0
  %2326 = vperm.xlu0 %2325, %v2220
  %v2327 = vpop.permute.xlu0 %2326
  %2330 = vset.pattern.permute.xlu0 0
  %2331 = vperm.xlu0 %2330, %v2221
  %v2332 = vpop.permute.xlu0 %2331
  %2335 = vset.pattern.permute.xlu0 0
  %2336 = vperm.xlu0 %2335, %v2222
  %v2337 = vpop.permute.xlu0 %2336
  %2340 = vset.pattern.permute.xlu0 0
  %2341 = vperm.xlu0 %2340, %v2223
  %v2342 = vpop.permute.xlu0 %2341
  %2345 = vset.pattern.permute.xlu0 0
  %2346 = vperm.xlu0 %2345, %v2224
  %v2347 = vpop.permute.xlu0 %2346
  %2350 = vset.pattern.permute.xlu0 0
  %2351 = vperm.xlu0 %2350, %v2225
  %v2352 = vpop.permute.xlu0 %2351
  %2355 = vset.pattern.permute.xlu0 0
  %2356 = vperm.xlu0 %2355, %v2226
  %v2357 = vpop.permute.xlu0 %2356
  %v2359 = vadd.f32 %v2287, %v2302
  %v2360 = vadd.f32 %v2288, %v2307
  %v2361 = vadd.f32 %v2289, %v2312
  %v2362 = vadd.f32 %v2290, %v2317
  %v2363 = vadd.f32 %v2291, %v2322
  %v2364 = vadd.f32 %v2292, %v2327
  %v2365 = vadd.f32 %v2293, %v2332
  %v2366 = vadd.f32 %v2294, %v2337
  %v2367 = vadd.f32 %v2295, %v2342
  %v2368 = vadd.f32 %v2296, %v2347
  %v2369 = vadd.f32 %v2297, %v2352
  %v2370 = vadd.f32 %v2298, %v2357
  %2371 = vst.msk [vmem:[%s7] sm:$0xff] %vm1907, %v2359
  %2372 = vst.msk [vmem:[%s7 + $0x8] sm:$0xff] %vm1907, %v2360
  %2373 = vst.msk [vmem:[%s7 + $0x10] sm:$0xff] %vm1907, %v2361
  %2374 = vst.msk [vmem:[%s7 + $0x18] sm:$0xff] %vm1907, %v2362
  %2375 = vst.msk [vmem:[%s7 + $0x20] sm:$0xff] %vm1907, %v2363
  %2376 = vst.msk [vmem:[%s7 + $0x28] sm:$0xff] %vm1907, %v2364
  %2377 = vst.msk [vmem:[%s7 + $0x30] sm:$0xff] %vm1907, %v2365
  %2378 = vst.msk [vmem:[%s7 + $0x38] sm:$0xff] %vm1907, %v2366
  %2379 = vst.msk [vmem:[%s7 + $0x40] sm:$0xff] %vm1907, %v2367
  %2380 = vst.msk [vmem:[%s7 + $0x48] sm:$0xff] %vm1907, %v2368
  %2381 = vst.msk [vmem:[%s7 + $0x50] sm:$0xff] %vm1907, %v2369
  %2382 = vst.msk [vmem:[%s7 + $0x58] sm:$0xff] %vm1907, %v2370
  // Predicated region
  $region30: #{se_project_bn.1} parent=0 // pred_check
    _
  $region31: #{se_project_bn.1} parent=0 // pred_check_branch
    %2384 = sbr.rel (0) target = $region33
  $region32: #{se_project_bn.1} parent=0 // pred_region
    _
  $region33: #{se_project_bn.1} parent=0 // pred_fallthru
    _
  // Predicated region
  $region34: #{se_project_bn.1} parent=0 // pred_check
    _
  $region35: #{se_project_bn.1} parent=0 // pred_check_branch
    %2386 = sbr.rel (0) target = $region37
  $region36: #{se_project_bn.1} parent=0 // pred_region
    _
  $region37: #{se_project_bn.1} parent=0 // pred_fallthru
    _

</llo_original>
